<compile_context>
chip_gen: v6e
topology: v6e:2x2x1
jax: 0.10.0
libtpu: 0.0.40
codegen_flags: <defaults>
</compile_context>

<pallas_src>
import jax
import jax.numpy as jnp
from jax.experimental import pallas as pl
from jax.experimental.pallas import tpu as pltpu


# ---------------------------------------------------------------------------
# Kernel body
# ---------------------------------------------------------------------------
def _hallucination_kernel(x_ref, w1_ref, b1_ref, w2_ref, b2_ref, o_ref):
    # Cast the x tile to the matmul dtype *in VMEM* (x streamed from HBM in its
    # native dtype; no extra HBM pass in the wrapper).
    x = x_ref[...].astype(w1_ref.dtype)
    # fc1: (Bt, Din) @ (Din, H) on the MXU with f32 accumulation.
    h = jnp.dot(x, w1_ref[...], preferred_element_type=jnp.float32)
    # Bias + ReLU epilogue in f32 (v5e VPU has no bf16 ALU anyway).
    # Dropout(0.2) is identity in eval/inference mode.
    h = jnp.maximum(h + b1_ref[...], 0.0)
    # fc2: (Bt, H) @ (H, Dout); cast back to the weight dtype only at the dot input.
    out = jnp.dot(h.astype(w2_ref.dtype), w2_ref[...],
                  preferred_element_type=jnp.float32)
    o_ref[...] = (out + b2_ref[...]).astype(o_ref.dtype)


# ---------------------------------------------------------------------------
# Tiling / VMEM sizing
# ---------------------------------------------------------------------------
_VMEM_SOFT_BUDGET = 12 * 1024 * 1024   # below the 16 MiB v5e scoped-VMEM default
_MAX_VMEM_LIMIT = 64 * 1024 * 1024     # v7x physical VMEM per TensorCore


def _vmem_estimate(block_b, din, h, dout, x_bytes, w_bytes, out_bytes, weight_bufs):
    """Rough per-call VMEM footprint: pipeline buffers + in-kernel temporaries."""
    est = 2 * block_b * din * x_bytes                     # x tile, double-buffered
    est += 2 * block_b * dout * out_bytes                 # out tile, double-buffered
    est += weight_bufs * (din * h + h * dout) * w_bytes   # resident weights
    est += weight_bufs * (h + dout) * 4                   # resident f32 biases
    est += block_b * (h + dout) * 4                       # f32 intermediates (h, acc)
    est += block_b * max(din, h) * w_bytes                # casted x / h copies
    return est


def _pick_block_b(batch, din, h, dout, x_bytes, w_bytes, out_bytes):
    """<=256-row tiles (>=2 grid steps once B>=512), multiple of 8, VMEM-bounded."""
    bb = batch if batch <= 256 else 256
    if bb != batch:
        bb = max(8, (bb // 8) * 8)
    # Shrink until the worst-case (double-buffered-weight fallback) estimate fits
    # under the smallest scoped-VMEM default of any TPU generation.
    while bb > 8 and _vmem_estimate(bb, din, h, dout, x_bytes, w_bytes,
                                    out_bytes, 2) > _VMEM_SOFT_BUDGET:
        bb = max(8, ((bb // 2) // 8) * 8)
    return bb


# ---------------------------------------------------------------------------
# pallas_call builder + one-time feature probe
# ---------------------------------------------------------------------------
# (core_parallel, single_buffer_weights) configurations, best first.
_CONFIGS = ((True, True), (True, False), (False, True), (False, False))
_CONFIG_CACHE = {"idx": None}


def _build_call(batch, din, h, dout, block_b, out_dtype, vmem_limit_bytes,
                core_parallel, single_buffer_weights):
    grid_b = pl.cdiv(batch, block_b)
    # Weights/biases have constant index_maps (resident across the grid); single-
    # buffer them so they don't steal VMEM headroom (matters on v7x's 64 MiB).
    resident = dict(pipeline_mode=pl.Buffered(1)) if single_buffer_weights else {}
    if core_parallel:
        # Explicitly shard the independent batch axis across TensorCores (v7x: 2).
        batch_sem = pltpu.CORE_PARALLEL
    else:
        batch_sem = "parallel"

    in_specs = [
        pl.BlockSpec((block_b, din), lambda i: (i, 0)),            # x tile
        pl.BlockSpec((din, h), lambda i: (0, 0), **resident),      # w1 (resident)
        pl.BlockSpec((1, h), lambda i: (0, 0), **resident),        # b1
        pl.BlockSpec((h, dout), lambda i: (0, 0), **resident),     # w2 (resident)
        pl.BlockSpec((1, dout), lambda i: (0, 0), **resident),     # b2
    ]
    compiler_kwargs = dict(dimension_semantics=(batch_sem,))
    if vmem_limit_bytes is not None:
        compiler_kwargs["vmem_limit_bytes"] = vmem_limit_bytes

    return pl.pallas_call(
        _hallucination_kernel,
        out_shape=jax.ShapeDtypeStruct((batch, dout), out_dtype),
        grid_spec=pltpu.PrefetchScalarGridSpec(
            num_scalar_prefetch=0,
            grid=(grid_b,),
            in_specs=in_specs,
            # Full Dout per tile -> lane-dense unmasked stores when Dout is a
            # multiple of 128 (true for the real 1024-wide model).
            out_specs=pl.BlockSpec((block_b, dout), lambda i: (i, 0)),
        ),
        compiler_params=pltpu.CompilerParams(**compiler_kwargs),
    )


# ---------------------------------------------------------------------------
# Public wrapper
# ---------------------------------------------------------------------------
def hallucination_net(x, w1, b1, w2, b2, *, block_b=None, out_dtype=None,
                      param_dtype=jnp.bfloat16):
    """Fused two-layer MLP (Linear -> [Dropout=id] -> ReLU -> Linear).

    x : (B, Din)   Din = in_channels + noise_channel; any float dtype (cast in-kernel)
    w1: (Din, H)   H = out_channels // 4  (PyTorch weight transposed to (in, out))
    b1: (H,) or (1, H)
    w2: (H, Dout)  Dout = out_channels
    b2: (Dout,) or (1, Dout)

    Precision: matmul inputs run at `param_dtype` (bf16 by default) with f32
    accumulation; the result is written as `out_dtype` (defaults to `param_dtype`).
    This halves HBM traffic vs f32 but drifts slightly from the f32 PyTorch module;
    pass param_dtype=out_dtype=jnp.float32 for the faithful f32 path.
    Convert weights once with `prepare_params`/`init_params` so no per-call casts
    are emitted.
    """
    if b1.ndim == 1:
        b1 = b1.reshape(1, -1)
    if b2.ndim == 1:
        b2 = b2.reshape(1, -1)
    B, Din = x.shape
    H = w1.shape[1]
    Dout = w2.shape[1]
    assert w1.shape == (Din, H) and b1.shape == (1, H), (w1.shape, b1.shape)
    assert w2.shape == (H, Dout) and b2.shape == (1, Dout), (w2.shape, b2.shape)

    if out_dtype is None:
        out_dtype = param_dtype

    # No-ops when params were pre-converted with prepare_params / init_params.
    w1c = w1.astype(param_dtype)
    w2c = w2.astype(param_dtype)
    b1c = b1.astype(jnp.float32)
    b2c = b2.astype(jnp.float32)

    x_bytes = jnp.dtype(x.dtype).itemsize
    w_bytes = jnp.dtype(param_dtype).itemsize
    out_bytes = jnp.dtype(out_dtype).itemsize

    if block_b is None:
        block_b = _pick_block_b(B, Din, H, Dout, x_bytes, w_bytes, out_bytes)
    block_b = min(block_b, B)
    assert block_b == B or block_b % 8 == 0, (B, block_b)

    # Only raise the scoped-VMEM limit when the resident weights force it
    # (large Dout/H); otherwise tiles are sized under every generation's default.
    est = _vmem_estimate(block_b, Din, H, Dout, x_bytes, w_bytes, out_bytes, 2)
    vmem_limit = None if est <= _VMEM_SOFT_BUDGET else min(int(est * 1.25),
                                                           _MAX_VMEM_LIMIT)
    # TODO(synk): if the bf16 weights alone exceed ~48 MiB the resident-weight layout
    # no longer fits v7x VMEM and a K/N-tiled weight variant would be needed.

    def call(core_parallel, single_buffer_weights):
        return _build_call(B, Din, H, Dout, block_b, out_dtype, vmem_limit,
                           core_parallel, single_buffer_weights)(
            x, w1c, b1c, w2c, b2c)

    idx = _CONFIG_CACHE["idx"]
    if idx is not None:
        return call(*_CONFIGS[idx])

    # One-time feature probe (CORE_PARALLEL, Buffered(1)).  The winning config is
    # cached so later calls never retrace/fall back; a genuine kernel error fails
    # every config and is re-raised from the last one.
    last_err = None
    for i, cfg in enumerate(_CONFIGS):
        try:
            out = jax.block_until_ready(call(*cfg))
            _CONFIG_CACHE["idx"] = i
            return out
        except Exception as err:  # one-time probe only; re-raised below if all fail
            last_err = err
    raise last_err


# ---------------------------------------------------------------------------
# Parameter helpers
# ---------------------------------------------------------------------------
def init_params(key, in_channels=1024, noise_channel=128, out_channels=1024,
                dtype=jnp.float32):
    """Matches HallucinationNet.__initialize_weights: Linear W ~ N(0, 0.1), b = 0.

    Weights are returned pre-transposed as (fan_in, fan_out) so the kernel runs
    row-major x @ W + b.
    """
    din = in_channels + noise_channel
    hidden = out_channels // 4
    k1, k2 = jax.random.split(key)
    w1 = (0.1 * jax.random.normal(k1, (din, hidden))).astype(dtype)
    b1 = jnp.zeros((1, hidden), dtype)
    w2 = (0.1 * jax.random.normal(k2, (hidden, out_channels))).astype(dtype)
    b2 = jnp.zeros((1, out_channels), dtype)
    return w1, b1, w2, b2


def prepare_params(w1, b1, w2, b2, param_dtype=jnp.bfloat16):
    """One-time conversion to the kernel's weight/bias dtypes (call once, reuse)."""
    if b1.ndim == 1:
        b1 = b1.reshape(1, -1)
    if b2.ndim == 1:
        b2 = b2.reshape(1, -1)
    return (w1.astype(param_dtype), b1.astype(jnp.float32),
            w2.astype(param_dtype), b2.astype(jnp.float32))


# TODO(synk): training-mode Dropout(0.2) is not implemented (would need
# pltpu.prng_seed / pltpu.prng_random_bits); this kernel is the inference forward.


if __name__ == "__main__":
    # Small shapes consistent with the module (in+noise -> out//4 -> out).
    batch = 40
    in_channels = 112
    noise_channel = 16
    out_channels = 256          # Din = 128, H = 64, Dout = 256

    key = jax.random.PRNGKey(0)
    kx, kp = jax.random.split(key)

    feature_noise = jax.random.normal(
        kx, (batch, in_channels + noise_channel), dtype=jnp.float32)

    # f32 "master" params matching the PyTorch init; convert once for the kernel.
    w1f, b1f, w2f, b2f = init_params(kp, in_channels, noise_channel, out_channels)
    w1b, b1b, w2b, b2b = prepare_params(w1f, b1f, w2f, b2f,
                                        param_dtype=jnp.bfloat16)

    # --- bf16 fast path (default), forced multi-tile grid with a ragged last tile ---
    out_bf16 = hallucination_net(feature_noise, w1b, b1b, w2b, b2b, block_b=16)
    out_bf16 = jax.block_until_ready(out_bf16)
    assert out_bf16.shape == (batch, out_channels)
    assert out_bf16.dtype == jnp.bfloat16

    # Reference at matched (bf16-input, f32-accumulate) precision.
    xb = feature_noise.astype(jnp.bfloat16)
    h_ref = jnp.maximum(
        jnp.dot(xb, w1b, preferred_element_type=jnp.float32) + b1b, 0.0)
    ref_b = jnp.dot(h_ref.astype(jnp.bfloat16), w2b,
                    preferred_element_type=jnp.float32) + b2b
    assert jnp.allclose(out_bf16.astype(jnp.float32), ref_b,
                        atol=5e-2, rtol=5e-2), "bf16 path mismatch vs reference"

    # --- full-f32 path (faithful to the PyTorch module; single-tile grid) ---
    out_f32 = hallucination_net(feature_noise, w1f, b1f, w2f, b2f,
                                param_dtype=jnp.float32, out_dtype=jnp.float32)
    out_f32 = jax.block_until_ready(out_f32)
    hp = jax.lax.Precision.HIGHEST
    h32 = jnp.maximum(
        jnp.dot(feature_noise, w1f, preferred_element_type=jnp.float32,
                precision=hp) + b1f, 0.0)
    ref_f = jnp.dot(h32, w2f, preferred_element_type=jnp.float32,
                    precision=hp) + b2f
    assert jnp.allclose(out_f32, ref_f, atol=1e-2, rtol=1e-2), \
        "f32 path mismatch vs reference"

    print("KERNEL_OK")
</pallas_src>

<mosaic_0001>
module attributes {stable_mosaic.version = 11 : i64} {
  func.func @_hallucination_kernel(%arg0: i32, %arg1: memref<16x128xf32, #tpu.memory_space<vmem>>, %arg2: memref<128x64xbf16, #tpu.memory_space<vmem>>, %arg3: memref<1x64xf32, #tpu.memory_space<vmem>>, %arg4: memref<64x256xbf16, #tpu.memory_space<vmem>>, %arg5: memref<1x256xf32, #tpu.memory_space<vmem>>, %arg6: memref<16x256xbf16, #tpu.memory_space<vmem>>) attributes {dimension_semantics = [#tpu.dimension_semantics<core_parallel>], iteration_bounds = array<i64: 3>, scalar_prefetch = 0 : i64, scratch_operands = 0 : i64, tpu.core_type = #tpu.core_type<tc>, window_params = [{transform_indices = @transform_0, window_bounds = array<i64: 16, 128>}, {pipeline_mode = #tpu.pipeline_mode<synchronous>, transform_indices = @transform_1, window_bounds = array<i64: 128, 64>}, {pipeline_mode = #tpu.pipeline_mode<synchronous>, transform_indices = @transform_2, window_bounds = array<i64: 1, 64>}, {pipeline_mode = #tpu.pipeline_mode<synchronous>, transform_indices = @transform_3, window_bounds = array<i64: 64, 256>}, {pipeline_mode = #tpu.pipeline_mode<synchronous>, transform_indices = @transform_4, window_bounds = array<i64: 1, 256>}, {transform_indices = @transform_5, window_bounds = array<i64: 16, 256>}]} {
    %c0 = arith.constant 0 : index
    %c0_0 = arith.constant 0 : index
    %0 = vector.load %arg1[%c0, %c0_0] : memref<16x128xf32, #tpu.memory_space<vmem>>, vector<16x128xf32>
    %1 = arith.truncf %0 : vector<16x128xf32> to vector<16x128xbf16>
    %c0_1 = arith.constant 0 : index
    %c0_2 = arith.constant 0 : index
    %2 = vector.load %arg2[%c0_1, %c0_2] : memref<128x64xbf16, #tpu.memory_space<vmem>>, vector<128x64xbf16>
    %cst = arith.constant dense<0.000000e+00> : vector<16x64xf32>
    %3 = tpu.matmul %1, %2, %cst {dimension_numbers = #tpu.dot_dimension_numbers<[1], [0], [0], [1], [0, 0, 1, 1], [], []>} : vector<16x128xbf16>, vector<128x64xbf16>, vector<16x64xf32> -> vector<16x64xf32>
    %c0_3 = arith.constant 0 : index
    %c0_4 = arith.constant 0 : index
    %4 = vector.load %arg3[%c0_3, %c0_4] : memref<1x64xf32, #tpu.memory_space<vmem>>, vector<1x64xf32>
    %5 = vector.broadcast %4 : vector<1x64xf32> to vector<16x64xf32>
    %6 = arith.addf %3, %5 : vector<16x64xf32>
    %cst_5 = arith.constant 0.000000e+00 : f32
    %7 = vector.broadcast %cst_5 : f32 to vector<16x64xf32>
    %8 = arith.maximumf %6, %7 : vector<16x64xf32>
    %9 = arith.truncf %8 : vector<16x64xf32> to vector<16x64xbf16>
    %c0_6 = arith.constant 0 : index
    %c0_7 = arith.constant 0 : index
    %10 = vector.load %arg4[%c0_6, %c0_7] : memref<64x256xbf16, #tpu.memory_space<vmem>>, vector<64x256xbf16>
    %cst_8 = arith.constant dense<0.000000e+00> : vector<16x256xf32>
    %11 = tpu.matmul %9, %10, %cst_8 {dimension_numbers = #tpu.dot_dimension_numbers<[1], [0], [0], [1], [0, 0, 1, 1], [], []>} : vector<16x64xbf16>, vector<64x256xbf16>, vector<16x256xf32> -> vector<16x256xf32>
    %c0_9 = arith.constant 0 : index
    %c0_10 = arith.constant 0 : index
    %12 = vector.load %arg5[%c0_9, %c0_10] : memref<1x256xf32, #tpu.memory_space<vmem>>, vector<1x256xf32>
    %13 = vector.broadcast %12 : vector<1x256xf32> to vector<16x256xf32>
    %14 = arith.addf %11, %13 : vector<16x256xf32>
    %15 = arith.truncf %14 : vector<16x256xf32> to vector<16x256xbf16>
    %c0_11 = arith.constant 0 : index
    %c0_12 = arith.constant 0 : index
    %16 = vector.load %arg6[%c0_11, %c0_12] : memref<16x256xbf16, #tpu.memory_space<vmem>>, vector<16x256xbf16>
    tpu.vector_store %arg6[%c0_11, %c0_12], %15 {strides = array<i32>} : memref<16x256xbf16, #tpu.memory_space<vmem>>, vector<16x256xbf16>,
    return
  }
  func.func @transform_0(%arg0: i32) -> (i32, i32) {
    %c0_i32 = arith.constant 0 : i32
    %c0_i32_0 = arith.constant 0 : i32
    return %arg0, %c0_i32 : i32, i32
  }
  func.func @transform_1(%arg0: i32) -> (i32, i32) {
    %c0_i32 = arith.constant 0 : i32
    %c0_i32_0 = arith.constant 0 : i32
    %c0_i32_1 = arith.constant 0 : i32
    return %c0_i32, %c0_i32_0 : i32, i32
  }
  func.func @transform_2(%arg0: i32) -> (i32, i32) {
    %c0_i32 = arith.constant 0 : i32
    %c0_i32_0 = arith.constant 0 : i32
    %c0_i32_1 = arith.constant 0 : i32
    return %c0_i32, %c0_i32_0 : i32, i32
  }
  func.func @transform_3(%arg0: i32) -> (i32, i32) {
    %c0_i32 = arith.constant 0 : i32
    %c0_i32_0 = arith.constant 0 : i32
    %c0_i32_1 = arith.constant 0 : i32
    return %c0_i32, %c0_i32_0 : i32, i32
  }
  func.func @transform_4(%arg0: i32) -> (i32, i32) {
    %c0_i32 = arith.constant 0 : i32
    %c0_i32_0 = arith.constant 0 : i32
    %c0_i32_1 = arith.constant 0 : i32
    return %c0_i32, %c0_i32_0 : i32, i32
  }
  func.func @transform_5(%arg0: i32) -> (i32, i32) {
    %c0_i32 = arith.constant 0 : i32
    %c0_i32_0 = arith.constant 0 : i32
    return %arg0, %c0_i32 : i32, i32
  }
}

module attributes {stable_mosaic.version = 11 : i64} {
  func.func @_hallucination_kernel(%arg0: i32, %arg1: memref<16x128xf32, #tpu.memory_space<vmem>>, %arg2: memref<128x64xbf16, #tpu.memory_space<vmem>>, %arg3: memref<1x64xf32, #tpu.memory_space<vmem>>, %arg4: memref<64x256xbf16, #tpu.memory_space<vmem>>, %arg5: memref<1x256xf32, #tpu.memory_space<vmem>>, %arg6: memref<16x256xbf16, #tpu.memory_space<vmem>>) attributes {dimension_semantics = [#tpu.dimension_semantics<core_parallel>], iteration_bounds = array<i64: 3>, scalar_prefetch = 0 : i64, scratch_operands = 0 : i64, tpu.core_type = #tpu.core_type<tc>, window_params = [{transform_indices = @transform_0, window_bounds = array<i64: 16, 128>}, {pipeline_mode = #tpu.pipeline_mode<synchronous>, transform_indices = @transform_1, window_bounds = array<i64: 128, 64>}, {pipeline_mode = #tpu.pipeline_mode<synchronous>, transform_indices = @transform_2, window_bounds = array<i64: 1, 64>}, {pipeline_mode = #tpu.pipeline_mode<synchronous>, transform_indices = @transform_3, window_bounds = array<i64: 64, 256>}, {pipeline_mode = #tpu.pipeline_mode<synchronous>, transform_indices = @transform_4, window_bounds = array<i64: 1, 256>}, {transform_indices = @transform_5, window_bounds = array<i64: 16, 256>}]} {
    %c0 = arith.constant 0 : index
    %c0_0 = arith.constant 0 : index
    %0 = vector.load %arg1[%c0, %c0_0] : memref<16x128xf32, #tpu.memory_space<vmem>>, vector<16x128xf32>
    %1 = arith.truncf %0 : vector<16x128xf32> to vector<16x128xbf16>
    %c0_1 = arith.constant 0 : index
    %c0_2 = arith.constant 0 : index
    %2 = vector.load %arg2[%c0_1, %c0_2] : memref<128x64xbf16, #tpu.memory_space<vmem>>, vector<128x64xbf16>
    %cst = arith.constant dense<0.000000e+00> : vector<16x64xf32>
    %3 = tpu.matmul %1, %2, %cst {dimension_numbers = #tpu.dot_dimension_numbers<[1], [0], [0], [1], [0, 0, 1, 1], [], []>} : vector<16x128xbf16>, vector<128x64xbf16>, vector<16x64xf32> -> vector<16x64xf32>
    %c0_3 = arith.constant 0 : index
    %c0_4 = arith.constant 0 : index
    %4 = vector.load %arg3[%c0_3, %c0_4] : memref<1x64xf32, #tpu.memory_space<vmem>>, vector<1x64xf32>
    %5 = vector.broadcast %4 : vector<1x64xf32> to vector<16x64xf32>
    %6 = arith.addf %3, %5 : vector<16x64xf32>
    %cst_5 = arith.constant 0.000000e+00 : f32
    %7 = vector.broadcast %cst_5 : f32 to vector<16x64xf32>
    %8 = arith.maximumf %6, %7 : vector<16x64xf32>
    %9 = arith.truncf %8 : vector<16x64xf32> to vector<16x64xbf16>
    %c0_6 = arith.constant 0 : index
    %c0_7 = arith.constant 0 : index
    %10 = vector.load %arg4[%c0_6, %c0_7] : memref<64x256xbf16, #tpu.memory_space<vmem>>, vector<64x256xbf16>
    %cst_8 = arith.constant dense<0.000000e+00> : vector<16x256xf32>
    %11 = tpu.matmul %9, %10, %cst_8 {dimension_numbers = #tpu.dot_dimension_numbers<[1], [0], [0], [1], [0, 0, 1, 1], [], []>} : vector<16x64xbf16>, vector<64x256xbf16>, vector<16x256xf32> -> vector<16x256xf32>
    %c0_9 = arith.constant 0 : index
    %c0_10 = arith.constant 0 : index
    %12 = vector.load %arg5[%c0_9, %c0_10] : memref<1x256xf32, #tpu.memory_space<vmem>>, vector<1x256xf32>
    %13 = vector.broadcast %12 : vector<1x256xf32> to vector<16x256xf32>
    %14 = arith.addf %11, %13 : vector<16x256xf32>
    %15 = arith.truncf %14 : vector<16x256xf32> to vector<16x256xbf16>
    %c0_11 = arith.constant 0 : index
    %c0_12 = arith.constant 0 : index
    %16 = vector.load %arg6[%c0_11, %c0_12] : memref<16x256xbf16, #tpu.memory_space<vmem>>, vector<16x256xbf16>
    tpu.vector_store %arg6[%c0_11, %c0_12], %15 {strides = array<i32>} : memref<16x256xbf16, #tpu.memory_space<vmem>>, vector<16x256xbf16>,
    return
  }
  func.func @transform_0(%arg0: i32) -> (i32, i32) {
    %c0_i32 = arith.constant 0 : i32
    %c0_i32_0 = arith.constant 0 : i32
    return %arg0, %c0_i32 : i32, i32
  }
  func.func @transform_1(%arg0: i32) -> (i32, i32) {
    %c0_i32 = arith.constant 0 : i32
    %c0_i32_0 = arith.constant 0 : i32
    %c0_i32_1 = arith.constant 0 : i32
    return %c0_i32, %c0_i32_0 : i32, i32
  }
  func.func @transform_2(%arg0: i32) -> (i32, i32) {
    %c0_i32 = arith.constant 0 : i32
    %c0_i32_0 = arith.constant 0 : i32
    %c0_i32_1 = arith.constant 0 : i32
    return %c0_i32, %c0_i32_0 : i32, i32
  }
  func.func @transform_3(%arg0: i32) -> (i32, i32) {
    %c0_i32 = arith.constant 0 : i32
    %c0_i32_0 = arith.constant 0 : i32
    %c0_i32_1 = arith.constant 0 : i32
    return %c0_i32, %c0_i32_0 : i32, i32
  }
  func.func @transform_4(%arg0: i32) -> (i32, i32) {
    %c0_i32 = arith.constant 0 : i32
    %c0_i32_0 = arith.constant 0 : i32
    %c0_i32_1 = arith.constant 0 : i32
    return %c0_i32, %c0_i32_0 : i32, i32
  }
  func.func @transform_5(%arg0: i32) -> (i32, i32) {
    %c0_i32 = arith.constant 0 : i32
    %c0_i32_0 = arith.constant 0 : i32
    return %arg0, %c0_i32 : i32, i32
  }
}

module attributes {stable_mosaic.version = 11 : i64} {
  func.func @_hallucination_kernel(%arg0: i32, %arg1: memref<16x128xf32, #tpu.memory_space<vmem>>, %arg2: memref<128x64xbf16, #tpu.memory_space<vmem>>, %arg3: memref<1x64xf32, #tpu.memory_space<vmem>>, %arg4: memref<64x256xbf16, #tpu.memory_space<vmem>>, %arg5: memref<1x256xf32, #tpu.memory_space<vmem>>, %arg6: memref<16x256xbf16, #tpu.memory_space<vmem>>) attributes {dimension_semantics = [#tpu.dimension_semantics<parallel>], iteration_bounds = array<i64: 3>, scalar_prefetch = 0 : i64, scratch_operands = 0 : i64, tpu.core_type = #tpu.core_type<tc>, window_params = [{transform_indices = @transform_0, window_bounds = array<i64: 16, 128>}, {pipeline_mode = #tpu.pipeline_mode<synchronous>, transform_indices = @transform_1, window_bounds = array<i64: 128, 64>}, {pipeline_mode = #tpu.pipeline_mode<synchronous>, transform_indices = @transform_2, window_bounds = array<i64: 1, 64>}, {pipeline_mode = #tpu.pipeline_mode<synchronous>, transform_indices = @transform_3, window_bounds = array<i64: 64, 256>}, {pipeline_mode = #tpu.pipeline_mode<synchronous>, transform_indices = @transform_4, window_bounds = array<i64: 1, 256>}, {transform_indices = @transform_5, window_bounds = array<i64: 16, 256>}]} {
    %c0 = arith.constant 0 : index
    %c0_0 = arith.constant 0 : index
    %0 = vector.load %arg1[%c0, %c0_0] : memref<16x128xf32, #tpu.memory_space<vmem>>, vector<16x128xf32>
    %1 = arith.truncf %0 : vector<16x128xf32> to vector<16x128xbf16>
    %c0_1 = arith.constant 0 : index
    %c0_2 = arith.constant 0 : index
    %2 = vector.load %arg2[%c0_1, %c0_2] : memref<128x64xbf16, #tpu.memory_space<vmem>>, vector<128x64xbf16>
    %cst = arith.constant dense<0.000000e+00> : vector<16x64xf32>
    %3 = tpu.matmul %1, %2, %cst {dimension_numbers = #tpu.dot_dimension_numbers<[1], [0], [0], [1], [0, 0, 1, 1], [], []>} : vector<16x128xbf16>, vector<128x64xbf16>, vector<16x64xf32> -> vector<16x64xf32>
    %c0_3 = arith.constant 0 : index
    %c0_4 = arith.constant 0 : index
    %4 = vector.load %arg3[%c0_3, %c0_4] : memref<1x64xf32, #tpu.memory_space<vmem>>, vector<1x64xf32>
    %5 = vector.broadcast %4 : vector<1x64xf32> to vector<16x64xf32>
    %6 = arith.addf %3, %5 : vector<16x64xf32>
    %cst_5 = arith.constant 0.000000e+00 : f32
    %7 = vector.broadcast %cst_5 : f32 to vector<16x64xf32>
    %8 = arith.maximumf %6, %7 : vector<16x64xf32>
    %9 = arith.truncf %8 : vector<16x64xf32> to vector<16x64xbf16>
    %c0_6 = arith.constant 0 : index
    %c0_7 = arith.constant 0 : index
    %10 = vector.load %arg4[%c0_6, %c0_7] : memref<64x256xbf16, #tpu.memory_space<vmem>>, vector<64x256xbf16>
    %cst_8 = arith.constant dense<0.000000e+00> : vector<16x256xf32>
    %11 = tpu.matmul %9, %10, %cst_8 {dimension_numbers = #tpu.dot_dimension_numbers<[1], [0], [0], [1], [0, 0, 1, 1], [], []>} : vector<16x64xbf16>, vector<64x256xbf16>, vector<16x256xf32> -> vector<16x256xf32>
    %c0_9 = arith.constant 0 : index
    %c0_10 = arith.constant 0 : index
    %12 = vector.load %arg5[%c0_9, %c0_10] : memref<1x256xf32, #tpu.memory_space<vmem>>, vector<1x256xf32>
    %13 = vector.broadcast %12 : vector<1x256xf32> to vector<16x256xf32>
    %14 = arith.addf %11, %13 : vector<16x256xf32>
    %15 = arith.truncf %14 : vector<16x256xf32> to vector<16x256xbf16>
    %c0_11 = arith.constant 0 : index
    %c0_12 = arith.constant 0 : index
    %16 = vector.load %arg6[%c0_11, %c0_12] : memref<16x256xbf16, #tpu.memory_space<vmem>>, vector<16x256xbf16>
    tpu.vector_store %arg6[%c0_11, %c0_12], %15 {strides = array<i32>} : memref<16x256xbf16, #tpu.memory_space<vmem>>, vector<16x256xbf16>,
    return
  }
  func.func @transform_0(%arg0: i32) -> (i32, i32) {
    %c0_i32 = arith.constant 0 : i32
    %c0_i32_0 = arith.constant 0 : i32
    return %arg0, %c0_i32 : i32, i32
  }
  func.func @transform_1(%arg0: i32) -> (i32, i32) {
    %c0_i32 = arith.constant 0 : i32
    %c0_i32_0 = arith.constant 0 : i32
    %c0_i32_1 = arith.constant 0 : i32
    return %c0_i32, %c0_i32_0 : i32, i32
  }
  func.func @transform_2(%arg0: i32) -> (i32, i32) {
    %c0_i32 = arith.constant 0 : i32
    %c0_i32_0 = arith.constant 0 : i32
    %c0_i32_1 = arith.constant 0 : i32
    return %c0_i32, %c0_i32_0 : i32, i32
  }
  func.func @transform_3(%arg0: i32) -> (i32, i32) {
    %c0_i32 = arith.constant 0 : i32
    %c0_i32_0 = arith.constant 0 : i32
    %c0_i32_1 = arith.constant 0 : i32
    return %c0_i32, %c0_i32_0 : i32, i32
  }
  func.func @transform_4(%arg0: i32) -> (i32, i32) {
    %c0_i32 = arith.constant 0 : i32
    %c0_i32_0 = arith.constant 0 : i32
    %c0_i32_1 = arith.constant 0 : i32
    return %c0_i32, %c0_i32_0 : i32, i32
  }
  func.func @transform_5(%arg0: i32) -> (i32, i32) {
    %c0_i32 = arith.constant 0 : i32
    %c0_i32_0 = arith.constant 0 : i32
    return %arg0, %c0_i32 : i32, i32
  }
}

module attributes {stable_mosaic.version = 11 : i64} {
  func.func @_hallucination_kernel(%arg0: i32, %arg1: memref<16x128xf32, #tpu.memory_space<vmem>>, %arg2: memref<128x64xbf16, #tpu.memory_space<vmem>>, %arg3: memref<1x64xf32, #tpu.memory_space<vmem>>, %arg4: memref<64x256xbf16, #tpu.memory_space<vmem>>, %arg5: memref<1x256xf32, #tpu.memory_space<vmem>>, %arg6: memref<16x256xbf16, #tpu.memory_space<vmem>>) attributes {dimension_semantics = [#tpu.dimension_semantics<parallel>], iteration_bounds = array<i64: 3>, scalar_prefetch = 0 : i64, scratch_operands = 0 : i64, tpu.core_type = #tpu.core_type<tc>, window_params = [{transform_indices = @transform_0, window_bounds = array<i64: 16, 128>}, {pipeline_mode = #tpu.pipeline_mode<synchronous>, transform_indices = @transform_1, window_bounds = array<i64: 128, 64>}, {pipeline_mode = #tpu.pipeline_mode<synchronous>, transform_indices = @transform_2, window_bounds = array<i64: 1, 64>}, {pipeline_mode = #tpu.pipeline_mode<synchronous>, transform_indices = @transform_3, window_bounds = array<i64: 64, 256>}, {pipeline_mode = #tpu.pipeline_mode<synchronous>, transform_indices = @transform_4, window_bounds = array<i64: 1, 256>}, {transform_indices = @transform_5, window_bounds = array<i64: 16, 256>}]} {
    %c0 = arith.constant 0 : index
    %c0_0 = arith.constant 0 : index
    %0 = vector.load %arg1[%c0, %c0_0] : memref<16x128xf32, #tpu.memory_space<vmem>>, vector<16x128xf32>
    %1 = arith.truncf %0 : vector<16x128xf32> to vector<16x128xbf16>
    %c0_1 = arith.constant 0 : index
    %c0_2 = arith.constant 0 : index
    %2 = vector.load %arg2[%c0_1, %c0_2] : memref<128x64xbf16, #tpu.memory_space<vmem>>, vector<128x64xbf16>
    %cst = arith.constant dense<0.000000e+00> : vector<16x64xf32>
    %3 = tpu.matmul %1, %2, %cst {dimension_numbers = #tpu.dot_dimension_numbers<[1], [0], [0], [1], [0, 0, 1, 1], [], []>} : vector<16x128xbf16>, vector<128x64xbf16>, vector<16x64xf32> -> vector<16x64xf32>
    %c0_3 = arith.constant 0 : index
    %c0_4 = arith.constant 0 : index
    %4 = vector.load %arg3[%c0_3, %c0_4] : memref<1x64xf32, #tpu.memory_space<vmem>>, vector<1x64xf32>
    %5 = vector.broadcast %4 : vector<1x64xf32> to vector<16x64xf32>
    %6 = arith.addf %3, %5 : vector<16x64xf32>
    %cst_5 = arith.constant 0.000000e+00 : f32
    %7 = vector.broadcast %cst_5 : f32 to vector<16x64xf32>
    %8 = arith.maximumf %6, %7 : vector<16x64xf32>
    %9 = arith.truncf %8 : vector<16x64xf32> to vector<16x64xbf16>
    %c0_6 = arith.constant 0 : index
    %c0_7 = arith.constant 0 : index
    %10 = vector.load %arg4[%c0_6, %c0_7] : memref<64x256xbf16, #tpu.memory_space<vmem>>, vector<64x256xbf16>
    %cst_8 = arith.constant dense<0.000000e+00> : vector<16x256xf32>
    %11 = tpu.matmul %9, %10, %cst_8 {dimension_numbers = #tpu.dot_dimension_numbers<[1], [0], [0], [1], [0, 0, 1, 1], [], []>} : vector<16x64xbf16>, vector<64x256xbf16>, vector<16x256xf32> -> vector<16x256xf32>
    %c0_9 = arith.constant 0 : index
    %c0_10 = arith.constant 0 : index
    %12 = vector.load %arg5[%c0_9, %c0_10] : memref<1x256xf32, #tpu.memory_space<vmem>>, vector<1x256xf32>
    %13 = vector.broadcast %12 : vector<1x256xf32> to vector<16x256xf32>
    %14 = arith.addf %11, %13 : vector<16x256xf32>
    %15 = arith.truncf %14 : vector<16x256xf32> to vector<16x256xbf16>
    %c0_11 = arith.constant 0 : index
    %c0_12 = arith.constant 0 : index
    %16 = vector.load %arg6[%c0_11, %c0_12] : memref<16x256xbf16, #tpu.memory_space<vmem>>, vector<16x256xbf16>
    tpu.vector_store %arg6[%c0_11, %c0_12], %15 {strides = array<i32>} : memref<16x256xbf16, #tpu.memory_space<vmem>>, vector<16x256xbf16>,
    return
  }
  func.func @transform_0(%arg0: i32) -> (i32, i32) {
    %c0_i32 = arith.constant 0 : i32
    %c0_i32_0 = arith.constant 0 : i32
    return %arg0, %c0_i32 : i32, i32
  }
  func.func @transform_1(%arg0: i32) -> (i32, i32) {
    %c0_i32 = arith.constant 0 : i32
    %c0_i32_0 = arith.constant 0 : i32
    %c0_i32_1 = arith.constant 0 : i32
    return %c0_i32, %c0_i32_0 : i32, i32
  }
  func.func @transform_2(%arg0: i32) -> (i32, i32) {
    %c0_i32 = arith.constant 0 : i32
    %c0_i32_0 = arith.constant 0 : i32
    %c0_i32_1 = arith.constant 0 : i32
    return %c0_i32, %c0_i32_0 : i32, i32
  }
  func.func @transform_3(%arg0: i32) -> (i32, i32) {
    %c0_i32 = arith.constant 0 : i32
    %c0_i32_0 = arith.constant 0 : i32
    %c0_i32_1 = arith.constant 0 : i32
    return %c0_i32, %c0_i32_0 : i32, i32
  }
  func.func @transform_4(%arg0: i32) -> (i32, i32) {
    %c0_i32 = arith.constant 0 : i32
    %c0_i32_0 = arith.constant 0 : i32
    %c0_i32_1 = arith.constant 0 : i32
    return %c0_i32, %c0_i32_0 : i32, i32
  }
  func.func @transform_5(%arg0: i32) -> (i32, i32) {
    %c0_i32 = arith.constant 0 : i32
    %c0_i32_0 = arith.constant 0 : i32
    return %arg0, %c0_i32 : i32, i32
  }
}

</mosaic_0001>

<llo_original>
// kernel: tpu_custom_call.1
$region0: #{tpu_custom_call.1}
  #allocation0 [shape = 'u32[]', space=smem, size = 0x4, offset = 0x4, fixed_abs, tag = 'smem constant byte address 0x4 - core index']
  #allocation1 [shape = 'u32[144,128]{1,0:T(1,128)}', space=vmem, size = 0x12000, scoped, tag = 'internal scratch']
  %s0 = inlined_call_operand.hbm [shape: f32[40,128], index: 0, kind: input, shape index: {}]
  %s1 = inlined_call_operand.vmem [shape: bf16[128,64], index: 1, kind: input, shape index: {}]
  %s2 = inlined_call_operand.vmem [shape: f32[1,64], index: 2, kind: input, shape index: {}]
  %s3 = inlined_call_operand.vmem [shape: bf16[64,256], index: 3, kind: input, shape index: {}]
  %s4 = inlined_call_operand.vmem [shape: f32[1,256], index: 4, kind: input, shape index: {}]
  %s5 = inlined_call_operand.hbm [shape: bf16[40,256], index: 5, kind: output, shape index: {}]
  %s6 = sld [smem:[#allocation0]]
  $region57: #{tpu_custom_call.1} parent=0
    _
  %s8 = ssub.s32 1, %s6
  %s9 = scalar_select 0, %s8, %s6
  $region1: #{tpu_custom_call.1} parent=0
    #allocation2 [shape = 'u8[16384]{0}', space=vmem, size = 0x4000, scoped, tag = 'input window, operand 0']
    #allocation3 [shape = 's32[2]{0}', space=sflag, size = 0x8, scoped, tag = 'scoped memory for tpu_custom_call.1']
    #allocation4 [shape = 's32[2]{0}', space=sflag, size = 0x8, scoped, tag = 'scoped memory for tpu_custom_call.1']
    #allocation5 [shape = 'u8[16384]{0}', space=vmem, size = 0x4000, scoped, tag = 'output window, operand 0']
    %10 = vsyncpa [#allocation3], 0
    %s11 = scalar_lea.sflag [#allocation3], 1
    %12 = vsyncpa %s11, 0
    %13 = vsyncpa [#allocation4], 0
    %s14 = scalar_lea.sflag [#allocation4], 1
    %15 = vsyncpa %s14, 0
    loop: start=0, step=1, limit=5
    $region2: #{tpu_custom_call.1} parent=1 // loop_pre_header
      _
    $region3: #{tpu_custom_call.1} parent=1 // loop_header
      %s17 = sphi 0, %s21
      %p18 = scmp.ge.s32.totalorder %s17, 5
      %s27 = sphi 0, %s29
      %s30 = sphi 0, %s27
      %s31 = sphi 0, %s30
      %s47 = sphi 0, %s31
      %s51 = sphi 0, %s51
      %s53 = sphi 0, %s51
      %s54 = sphi 0, %s53
      %s68 = sphi 0, %s54
      %s72 = sphi 0, %s72
      %s74 = sphi 0, %s72
      %s75 = sphi 0, %s74
      %s89 = sphi 0, %s75
      %s93 = sphi 0, %s93
      %s95 = sphi 0, %s93
      %s96 = sphi 0, %s95
      %s110 = sphi 0, %s96
      %s114 = sphi 0, %s114
      %s116 = sphi 0, %s114
      %s117 = sphi 0, %s116
      %s131 = sphi 0, %s117
      %s137 = sphi 0, %s139
      %s140 = sphi 0, %s137
      %s141 = sphi 0, %s140
      %s157 = sphi 0, %s141
    $region4: #{tpu_custom_call.1} parent=1 // loop_header_branch
      %20 = sbr.rel (%p18) target = $region8
    $region5: #{tpu_custom_call.1} parent=1 // loop_body
      %s22 = ssub.s32 %s17, 1
      %s23 = ssub.s32 %s17, 2
      %s24 = sadd.s32 %s17, 1
      %s25 = ssub.s32 %s17, %s24
      %p26 = scmp.eq.s32.totalorder %s25, 0
      %s28 = sadd.s32 %s27, 1
      %s29 = scalar_select %p26, %s27, %s28
      %p32 = pneg %p26
      %p33 = scmp.eq.s32.totalorder %s17, 2
      %p34 = por %p32, %p33
      %p35 = scmp.ne.s32.totalorder %s27, %s30
      %p36 = scmp.eq.s32.totalorder %s17, 0
      %p37 = por %p35, %p36
      %p38 = scmp.ne.s32.totalorder %s27, %s30
      %p39 = scmp.eq.s32.totalorder %s22, 2
      %p40 = por %p38, %p39
      %p41 = scmp.ne.s32.totalorder %s30, %s31
      %p42 = scmp.eq.s32.totalorder %s22, 0
      %p43 = por %p41, %p42
      %p44 = scmp.ne.s32.totalorder %s30, %s31
      %p45 = scmp.eq.s32.totalorder %s23, 2
      %p46 = por %p44, %p45
      %p48 = scmp.ne.s32.totalorder %s31, %s47
      %p49 = scmp.eq.s32.totalorder %s23, 0
      %p50 = por %p48, %p49
      %s52 = sadd.s32 %s51, 1
      %p55 = scmp.eq.s32.totalorder %s17, 2
      %p56 = scmp.ne.s32.totalorder %s51, %s53
      %p57 = scmp.eq.s32.totalorder %s17, 0
      %p58 = por %p56, %p57
      %p59 = scmp.ne.s32.totalorder %s51, %s53
      %p60 = scmp.eq.s32.totalorder %s22, 2
      %p61 = por %p59, %p60
      %p62 = scmp.ne.s32.totalorder %s53, %s54
      %p63 = scmp.eq.s32.totalorder %s22, 0
      %p64 = por %p62, %p63
      %p65 = scmp.ne.s32.totalorder %s53, %s54
      %p66 = scmp.eq.s32.totalorder %s23, 2
      %p67 = por %p65, %p66
      %p69 = scmp.ne.s32.totalorder %s54, %s68
      %p70 = scmp.eq.s32.totalorder %s23, 0
      %p71 = por %p69, %p70
      %s73 = sadd.s32 %s72, 1
      %p76 = scmp.eq.s32.totalorder %s17, 2
      %p77 = scmp.ne.s32.totalorder %s72, %s74
      %p78 = scmp.eq.s32.totalorder %s17, 0
      %p79 = por %p77, %p78
      %p80 = scmp.ne.s32.totalorder %s72, %s74
      %p81 = scmp.eq.s32.totalorder %s22, 2
      %p82 = por %p80, %p81
      %p83 = scmp.ne.s32.totalorder %s74, %s75
      %p84 = scmp.eq.s32.totalorder %s22, 0
      %p85 = por %p83, %p84
      %p86 = scmp.ne.s32.totalorder %s74, %s75
      %p87 = scmp.eq.s32.totalorder %s23, 2
      %p88 = por %p86, %p87
      %p90 = scmp.ne.s32.totalorder %s75, %s89
      %p91 = scmp.eq.s32.totalorder %s23, 0
      %p92 = por %p90, %p91
      %s94 = sadd.s32 %s93, 1
      %p97 = scmp.eq.s32.totalorder %s17, 2
      %p98 = scmp.ne.s32.totalorder %s93, %s95
      %p99 = scmp.eq.s32.totalorder %s17, 0
      %p100 = por %p98, %p99
      %p101 = scmp.ne.s32.totalorder %s93, %s95
      %p102 = scmp.eq.s32.totalorder %s22, 2
      %p103 = por %p101, %p102
      %p104 = scmp.ne.s32.totalorder %s95, %s96
      %p105 = scmp.eq.s32.totalorder %s22, 0
      %p106 = por %p104, %p105
      %p107 = scmp.ne.s32.totalorder %s95, %s96
      %p108 = scmp.eq.s32.totalorder %s23, 2
      %p109 = por %p107, %p108
      %p111 = scmp.ne.s32.totalorder %s96, %s110
      %p112 = scmp.eq.s32.totalorder %s23, 0
      %p113 = por %p111, %p112
      %s115 = sadd.s32 %s114, 1
      %p118 = scmp.eq.s32.totalorder %s17, 2
      %p119 = scmp.ne.s32.totalorder %s114, %s116
      %p120 = scmp.eq.s32.totalorder %s17, 0
      %p121 = por %p119, %p120
      %p122 = scmp.ne.s32.totalorder %s114, %s116
      %p123 = scmp.eq.s32.totalorder %s22, 2
      %p124 = por %p122, %p123
      %p125 = scmp.ne.s32.totalorder %s116, %s117
      %p126 = scmp.eq.s32.totalorder %s22, 0
      %p127 = por %p125, %p126
      %p128 = scmp.ne.s32.totalorder %s116, %s117
      %p129 = scmp.eq.s32.totalorder %s23, 2
      %p130 = por %p128, %p129
      %p132 = scmp.ne.s32.totalorder %s117, %s131
      %p133 = scmp.eq.s32.totalorder %s23, 0
      %p134 = por %p132, %p133
      %s135 = ssub.s32 %s17, %s24
      %p136 = scmp.eq.s32.totalorder %s135, 0
      %s138 = sadd.s32 %s137, 1
      %s139 = scalar_select %p136, %s137, %s138
      %p142 = pneg %p136
      %p143 = scmp.eq.s32.totalorder %s17, 2
      %p144 = por %p142, %p143
      %p145 = scmp.ne.s32.totalorder %s137, %s140
      %p146 = scmp.eq.s32.totalorder %s17, 0
      %p147 = por %p145, %p146
      %p148 = scmp.ne.s32.totalorder %s137, %s140
      %p149 = scmp.eq.s32.totalorder %s22, 2
      %p150 = por %p148, %p149
      %p151 = scmp.ne.s32.totalorder %s140, %s141
      %p152 = scmp.eq.s32.totalorder %s22, 0
      %p153 = por %p151, %p152
      %p154 = scmp.ne.s32.totalorder %s140, %s141
      %p155 = scmp.eq.s32.totalorder %s23, 2
      %p156 = por %p154, %p155
      %p158 = scmp.ne.s32.totalorder %s141, %s157
      %p159 = scmp.eq.s32.totalorder %s23, 0
      %p160 = por %p158, %p159
      %p161 = scmp.le.s32.totalorder 1, %s17
      %p162 = scmp.lt.s32.totalorder %s17, 4
      %p163 = pnand %p161, %p162
      %p164 = pneg %p163
      // Predicated region
      $region9: #{tpu_custom_call.1} parent=5 // pred_check
        _
      $region10: #{tpu_custom_call.1} parent=5 // pred_check_branch
        %166 = sbr.rel (%p163) target = $region12
      $region11: #{tpu_custom_call.1} parent=5 // pred_region
        %s167 = ssub.s32 %s17, 1
        // Predicated region
        $region13: #{tpu_custom_call.1} parent=11 // pred_check
          %p168 = pneg %p64
        $region14: #{tpu_custom_call.1} parent=11 // pred_check_branch
          %170 = sbr.rel (%p168) target = $region16
        $region15: #{tpu_custom_call.1} parent=11 // pred_region
          _
        $region16: #{tpu_custom_call.1} parent=11 // pred_fallthru
          _
        // Predicated region
        $region17: #{tpu_custom_call.1} parent=11 // pred_check
          %p171 = pneg %p85
        $region18: #{tpu_custom_call.1} parent=11 // pred_check_branch
          %173 = sbr.rel (%p171) target = $region20
        $region19: #{tpu_custom_call.1} parent=11 // pred_region
          _
        $region20: #{tpu_custom_call.1} parent=11 // pred_fallthru
          _
        // Predicated region
        $region21: #{tpu_custom_call.1} parent=11 // pred_check
          %p174 = pneg %p106
        $region22: #{tpu_custom_call.1} parent=11 // pred_check_branch
          %176 = sbr.rel (%p174) target = $region24
        $region23: #{tpu_custom_call.1} parent=11 // pred_region
          _
        $region24: #{tpu_custom_call.1} parent=11 // pred_fallthru
          _
        // Predicated region
        $region25: #{tpu_custom_call.1} parent=11 // pred_check
          %p177 = pneg %p127
        $region26: #{tpu_custom_call.1} parent=11 // pred_check_branch
          %179 = sbr.rel (%p177) target = $region28
        $region27: #{tpu_custom_call.1} parent=11 // pred_region
          _
        $region28: #{tpu_custom_call.1} parent=11 // pred_fallthru
          _
      $region12: #{tpu_custom_call.1} parent=5 // pred_fallthru
        _
      %p180 = scmp.lt.s32.totalorder %s17, 3
      // Predicated region
      $region29: #{tpu_custom_call.1} parent=5 // pred_check
        %p181 = pneg %p180
      $region30: #{tpu_custom_call.1} parent=5 // pred_check_branch
        %183 = sbr.rel (%p181) target = $region32
      $region31: #{tpu_custom_call.1} parent=5 // pred_region
        // Predicated region
        $region33: #{tpu_custom_call.1} parent=31 // pred_check
          %p184 = pneg %p37
        $region34: #{tpu_custom_call.1} parent=31 // pred_check_branch
          %186 = sbr.rel (%p184) target = $region36
        $region35: #{tpu_custom_call.1} parent=31 // pred_region
          %s187 = sand.u32 %s27, 1
          %s188 = scalar_lea.sflag [#allocation3], %s187
          %s189 = sand.u32 %s27, 1
          %s190 = smul.addr %s189, 16
          %s191 = scalar_lea.vmem [#allocation2], %s190
          %s192 = smul.u32 2, %s17
          %s193 = ssub.s32 5, %s192
          %p194 = scmp.lt.s32.totalorder %s193, 2
          %s195 = scalar_select %p194, %s193, 2
          %s196 = smul.u32 128, %s195
          %s198 = ssub.s32 256, %s196
          %199 = vsyncadd %s188, %s198
          %p200 = scmp.ne.s32.totalorder 0, %s196
          %s201 = smul.addr %s192, 128
          %s202 = scalar_lea.hbm %s0, %s201
          %s203 = smul.u32 8, %s195
          %s204 = sshll.u32 %s191, 4
          %s205 = int_to_ptr.vmem [resolvable:$true] %s204
          %s206 = sshll.u32 %s203, 4
          %210 = dma.hbm_to_vmem [thread:$0]  (%p200), %s202, %s206, %s205, %s188, 128, 128, 8
        $region36: #{tpu_custom_call.1} parent=31 // pred_fallthru
          _
      $region32: #{tpu_custom_call.1} parent=5 // pred_fallthru
        _
      %p211 = scmp.le.s32.totalorder 1, %s17
      %p212 = scmp.lt.s32.totalorder %s17, 4
      %p213 = pnand %p211, %p212
      %p214 = pneg %p213
      // Predicated region
      $region37: #{tpu_custom_call.1} parent=5 // pred_check
        _
      $region38: #{tpu_custom_call.1} parent=5 // pred_check_branch
        %216 = sbr.rel (%p213) target = $region40
      $region39: #{tpu_custom_call.1} parent=5 // pred_region
        %s217 = ssub.s32 %s17, 1
        %s218 = sand.u32 %s30, 1
        %s219 = scalar_lea.sflag [#allocation3], %s218
        %s220 = sand.u32 %s30, 1
        %s221 = smul.addr %s220, 16
        %s222 = scalar_lea.vmem [#allocation2], %s221
        // Predicated region
        $region41: #{tpu_custom_call.1} parent=39 // pred_check
          %p223 = pneg %p43
        $region42: #{tpu_custom_call.1} parent=39 // pred_check_branch
          %225 = sbr.rel (%p223) target = $region44
        $region43: #{tpu_custom_call.1} parent=39 // pred_region
          %226 = dma.done %s219, 256
        $region44: #{tpu_custom_call.1} parent=39 // pred_fallthru
          _
        %s227 = sand.u32 %s30, 1
        %s228 = scalar_lea.sflag [#allocation3], %s227
        %s229 = sand.u32 %s30, 1
        %s230 = smul.addr %s229, 16
        %s231 = scalar_lea.vmem [#allocation2], %s230
        %p232 = pneg %p43
        %p233 = pneg %p40
        %p234 = pneg %p64
        %p235 = pneg %p61
        %p236 = pneg %p85
        %p237 = pneg %p82
        %p238 = pneg %p106
        %p239 = pneg %p103
        %p240 = pneg %p127
        %p241 = pneg %p124
        %p242 = pneg %p153
        %p243 = pneg %p150
        %s244 = sand.u32 %s140, 1
        %s245 = scalar_lea.sflag [#allocation4], %s244
        %s246 = sand.u32 %s140, 1
        %s247 = smul.addr %s246, 16
        %s248 = scalar_lea.vmem [#allocation5], %s247
        %s249 = smul.u32 2, %s22
        %s250 = ssub.s32 5, %s249
        %p251 = scmp.lt.s32.totalorder %s250, 2
        %s252 = scalar_select %p251, %s250, 2
        %s253 = smul.u32 128, %s252
        %s254 = smul.u32 2, %s22
        %s255 = ssub.s32 5, %s254
        %p256 = scmp.lt.s32.totalorder %s255, 2
        %s257 = scalar_select %p256, %s255, 2
        %s258 = smul.u32 64, %s257
        %s259 = smul.u32 %s258, 2
        %v261 = vld [vmem:[%s222] sm:$0xff]
        %v262 = vld [vmem:[%s222 + $0x8] sm:$0xff]
        %v263 = vpack.c.bf16 %v262, %v261
        %v264 = vld [vmem:[%s1] sm:$0xf]
        %v265 = vld [vmem:[%s1 + $0x4] sm:$0xf]
        %v266 = vld [vmem:[%s1 + $0x8] sm:$0xf]
        %v267 = vld [vmem:[%s1 + $0xc] sm:$0xf]
        %v268 = vld [vmem:[%s1 + $0x10] sm:$0xf]
        %v269 = vld [vmem:[%s1 + $0x14] sm:$0xf]
        %v270 = vld [vmem:[%s1 + $0x18] sm:$0xf]
        %v271 = vld [vmem:[%s1 + $0x1c] sm:$0xf]
        %v272 = vld [vmem:[%s1 + $0x20] sm:$0xf]
        %v273 = vld [vmem:[%s1 + $0x24] sm:$0xf]
        %v274 = vld [vmem:[%s1 + $0x28] sm:$0xf]
        %v275 = vld [vmem:[%s1 + $0x2c] sm:$0xf]
        %v276 = vld [vmem:[%s1 + $0x30] sm:$0xf]
        %v277 = vld [vmem:[%s1 + $0x34] sm:$0xf]
        %v278 = vld [vmem:[%s1 + $0x38] sm:$0xf]
        %v279 = vld [vmem:[%s1 + $0x3c] sm:$0xf]
        %v280 = vld [vmem:[%s2] sm:$0x1]
        %v282 = vlaneseq
        %v283 = vshrl.u32 %v282, 7
        %v284 = vsub.s32 0, %v283
        %v285 = vrot.slane %v280, %v284
        %v303 = vunpack.c.l.b16 %v264
        %v304 = vunpack.c.l.b16 %v265
        %v305 = vunpack.c.l.b16 %v266
        %v306 = vunpack.c.l.b16 %v267
        %v307 = vunpack.c.l.b16 %v268
        %v308 = vunpack.c.l.b16 %v269
        %v309 = vunpack.c.l.b16 %v270
        %v310 = vunpack.c.l.b16 %v271
        %v311 = vunpack.c.l.b16 %v272
        %v312 = vunpack.c.l.b16 %v273
        %v313 = vunpack.c.l.b16 %v274
        %v314 = vunpack.c.l.b16 %v275
        %v315 = vunpack.c.l.b16 %v276
        %v316 = vunpack.c.l.b16 %v277
        %v317 = vunpack.c.l.b16 %v278
        %v318 = vunpack.c.l.b16 %v279
        %v319 = vpack.c.b16 %v304, %v303
        %v320 = vpack.c.b16 %v306, %v305
        %v321 = vpack.c.b16 %v308, %v307
        %v322 = vpack.c.b16 %v310, %v309
        %v323 = vpack.c.b16 %v312, %v311
        %v324 = vpack.c.b16 %v314, %v313
        %v325 = vpack.c.b16 %v316, %v315
        %v326 = vpack.c.b16 %v318, %v317
        %335 = vmatprep.subr.bf16.mxu0 0
        %336 = vmatpush1.bf16.msra.mxu0 %v326
        %337 = vmatprep.subr.bf16.mxu0 0
        %338 = vmatpush1.bf16.msra.mxu0 %v325
        %339 = vmatprep.subr.bf16.mxu0 0
        %340 = vmatpush1.bf16.msra.mxu0 %v324
        %341 = vmatprep.subr.bf16.mxu0 0
        %342 = vmatpush1.bf16.msra.mxu0 %v323
        %343 = vmatprep.subr.bf16.mxu0 0
        %344 = vmatpush1.bf16.msra.mxu0 %v322
        %345 = vmatprep.subr.bf16.mxu0 0
        %346 = vmatpush1.bf16.msra.mxu0 %v321
        %347 = vmatprep.subr.bf16.mxu0 0
        %348 = vmatpush1.bf16.msra.mxu0 %v320
        %349 = vmatprep.subr.bf16.mxu0 0
        %350 = vmatpush1.bf16.msra.mxu0 %v319
        %351 = vmatprep.subr.bf16.mxu0 0
        %352 = vmatpush2.bf16.msra.mxu0 0
        %353 = vmatprep.subr.bf16.mxu0 0
        %354 = vmatpush2.bf16.msra.mxu0 0
        %355 = vmatprep.subr.bf16.mxu0 0
        %356 = vmatpush2.bf16.msra.mxu0 0
        %357 = vmatprep.subr.bf16.mxu0 0
        %358 = vmatpush2.bf16.msra.mxu0 0
        %359 = vmatprep.subr.bf16.mxu0 0
        %360 = vmatpush2.bf16.msra.mxu0 0
        %361 = vmatprep.subr.bf16.mxu0 0
        %362 = vmatpush2.bf16.msra.mxu0 0
        %363 = vmatprep.subr.bf16.mxu0 0
        %364 = vmatpush2.bf16.msra.mxu0 0
        %365 = vmatprep.subr.bf16.mxu0 0
        %366 = vmatpush2.bf16.msra.mxu0 0
        %367 = vmatprep.mubr.bf16.mxu0 0
        %368 = vmatmul.mubr.bf16.gmra.mxu0 %v263
        %v369 = vpop.f32.mrf.mxu0
        %v370 = vadd.f32 %v285, %v369
        %v371 = vpop.f32.mrf.mxu0
        %v372 = vpop.f32.mrf.mxu0
        %v373 = vadd.f32 %v285, %v372
        %v374 = vpop.f32.mrf.mxu0
        %375 = vdwg.mxu0
        %v376 = vmax.f32 %v370, 0.0
        %v377 = vmax.f32 %v373, 0.0
        %v378 = vpack.c.bf16 %v377, %v376
        %v379 = vld [vmem:[%s3] sm:$0xff]
        %v380 = vld [vmem:[%s3 + $0x8] sm:$0xff]
        %v381 = vld [vmem:[%s3 + $0x10] sm:$0xff]
        %v382 = vld [vmem:[%s3 + $0x18] sm:$0xff]
        %v383 = vld [vmem:[%s3 + $0x20] sm:$0xff]
        %v384 = vld [vmem:[%s3 + $0x28] sm:$0xff]
        %v385 = vld [vmem:[%s3 + $0x30] sm:$0xff]
        %v386 = vld [vmem:[%s3 + $0x38] sm:$0xff]
        %v387 = vld [vmem:[%s4] sm:$0x3]
        %v389 = vlaneseq
        %v390 = vshrl.u32 %v389, 7
        %v391 = vsub.s32 0, %v390
        %v392 = vrot.slane %v387, %v391
        %v393 = vlaneseq
        %v394 = vshrl.u32 %v393, 7
        %v395 = vsub.s32 1, %v394
        %v396 = vrot.slane %v387, %v395
        %v407 = vunpack.c.l.b16 %v379
        %v408 = vunpack.c.h.b16 %v379
        %v409 = vunpack.c.l.b16 %v380
        %v410 = vunpack.c.h.b16 %v380
        %v411 = vunpack.c.l.b16 %v381
        %v412 = vunpack.c.h.b16 %v381
        %v413 = vunpack.c.l.b16 %v382
        %v414 = vunpack.c.h.b16 %v382
        %v415 = vunpack.c.l.b16 %v383
        %v416 = vunpack.c.h.b16 %v383
        %v417 = vunpack.c.l.b16 %v384
        %v418 = vunpack.c.h.b16 %v384
        %v419 = vunpack.c.l.b16 %v385
        %v420 = vunpack.c.h.b16 %v385
        %v421 = vunpack.c.l.b16 %v386
        %v422 = vunpack.c.h.b16 %v386
        %v423 = vpack.c.b16 %v409, %v407
        %v424 = vpack.c.b16 %v410, %v408
        %v425 = vpack.c.b16 %v413, %v411
        %v426 = vpack.c.b16 %v414, %v412
        %v427 = vpack.c.b16 %v417, %v415
        %v428 = vpack.c.b16 %v418, %v416
        %v429 = vpack.c.b16 %v421, %v419
        %v430 = vpack.c.b16 %v422, %v420
        %vm439 = vcmask 523264
        %v441 = vsel %vm439, %v378, 0
        %443 = vmatprep.subr.bf16.mxu0 0
        %444 = vmatpush1.bf16.msra.mxu0 0
        %445 = vmatprep.subr.bf16.mxu0 0
        %446 = vmatpush1.bf16.msra.mxu0 0
        %447 = vmatprep.subr.bf16.mxu0 0
        %448 = vmatpush1.bf16.msra.mxu0 0
        %449 = vmatprep.subr.bf16.mxu0 0
        %450 = vmatpush1.bf16.msra.mxu0 0
        %451 = vmatprep.subr.bf16.mxu0 %v430
        %452 = vmatpush1.bf16.msra.mxu0 %v429
        %453 = vmatprep.subr.bf16.mxu0 %v428
        %454 = vmatpush1.bf16.msra.mxu0 %v427
        %455 = vmatprep.subr.bf16.mxu0 %v426
        %456 = vmatpush1.bf16.msra.mxu0 %v425
        %457 = vmatprep.subr.bf16.mxu0 %v424
        %458 = vmatpush1.bf16.msra.mxu0 %v423
        %459 = vmatprep.subr.bf16.mxu0 0
        %460 = vmatpush2.bf16.msra.mxu0 0
        %461 = vmatprep.subr.bf16.mxu0 0
        %462 = vmatpush2.bf16.msra.mxu0 0
        %463 = vmatprep.subr.bf16.mxu0 0
        %464 = vmatpush2.bf16.msra.mxu0 0
        %465 = vmatprep.subr.bf16.mxu0 0
        %466 = vmatpush2.bf16.msra.mxu0 0
        %467 = vmatprep.subr.bf16.mxu0 0
        %468 = vmatpush2.bf16.msra.mxu0 0
        %469 = vmatprep.subr.bf16.mxu0 0
        %470 = vmatpush2.bf16.msra.mxu0 0
        %471 = vmatprep.subr.bf16.mxu0 0
        %472 = vmatpush2.bf16.msra.mxu0 0
        %473 = vmatprep.subr.bf16.mxu0 0
        %474 = vmatpush2.bf16.msra.mxu0 0
        %475 = vmatprep.mubr.bf16.mxu0 0
        %476 = vmatmul.mubr.bf16.gmra.mxu0 %v441
        %v477 = vpop.f32.mrf.mxu0
        %v478 = vadd.f32 %v392, %v477
        %v479 = vpop.f32.mrf.mxu0
        %v480 = vadd.f32 %v396, %v479
        %v481 = vpop.f32.mrf.mxu0
        %v482 = vadd.f32 %v392, %v481
        %v483 = vpop.f32.mrf.mxu0
        %v484 = vadd.f32 %v396, %v483
        %485 = vdwg.mxu0
        %v486 = vpack.c.bf16 %v482, %v478
        %v487 = vpack.c.bf16 %v484, %v480
        %v490 = vunpack.c.l.b16 %v486
        %v491 = vunpack.c.l.b16 %v487
        %v492 = vunpack.c.h.b16 %v486
        %v493 = vunpack.c.h.b16 %v487
        %v494 = vpack.c.b16 %v491, %v490
        %v495 = vpack.c.b16 %v493, %v492
        %498 = vst [vmem:[%s248] sm:$0xff] %v494
        %499 = vst [vmem:[%s248 + $0x8] sm:$0xff] %v495
        %s500 = sand.u32 %s140, 1
        %s501 = scalar_lea.sflag [#allocation4], %s500
        %s502 = sand.u32 %s140, 1
        %s503 = smul.addr %s502, 16
        %s504 = scalar_lea.vmem [#allocation5], %s503
        // Predicated region
        $region45: #{tpu_custom_call.1} parent=39 // pred_check
          %p505 = pneg %p150
        $region46: #{tpu_custom_call.1} parent=39 // pred_check_branch
          %507 = sbr.rel (%p505) target = $region48
        $region47: #{tpu_custom_call.1} parent=39 // pred_region
          %s508 = smul.u32 2, %s22
          %s509 = ssub.s32 5, %s508
          %p510 = scmp.lt.s32.totalorder %s509, 2
          %s511 = scalar_select %p510, %s509, 2
          %s512 = smul.u32 64, %s511
          %s513 = smul.u32 %s512, 2
          %s515 = ssub.s32 256, %s513
          %516 = vsyncadd %s501, %s515
          %p517 = scmp.ne.s32.totalorder 0, %s513
          %s518 = smul.addr %s508, 2
          %s519 = smul.addr %s518, 64
          %s520 = scalar_lea.hbm %s5, %s519
          %s521 = smul.u32 8, %s511
          %s522 = sshll.u32 %s504, 4
          %s523 = int_to_ptr.vmem [resolvable:$true] %s522
          %s524 = sshll.u32 %s521, 4
          %528 = dma.vmem_to_hbm [thread:$0]  (%p517), %s523, %s524, %s520, %s501, 128, 128, 8
        $region48: #{tpu_custom_call.1} parent=39 // pred_fallthru
          _
      $region40: #{tpu_custom_call.1} parent=5 // pred_fallthru
        _
      %p529 = scmp.le.s32.totalorder 2, %s17
      // Predicated region
      $region49: #{tpu_custom_call.1} parent=5 // pred_check
        %p530 = pneg %p529
      $region50: #{tpu_custom_call.1} parent=5 // pred_check_branch
        %532 = sbr.rel (%p530) target = $region52
      $region51: #{tpu_custom_call.1} parent=5 // pred_region
        %s533 = ssub.s32 %s17, 2
        // Predicated region
        $region53: #{tpu_custom_call.1} parent=51 // pred_check
          %p534 = pneg %p156
        $region54: #{tpu_custom_call.1} parent=51 // pred_check_branch
          %536 = sbr.rel (%p534) target = $region56
        $region55: #{tpu_custom_call.1} parent=51 // pred_region
          %s537 = sand.u32 %s141, 1
          %s538 = scalar_lea.sflag [#allocation4], %s537
          %s539 = sand.u32 %s141, 1
          %s540 = smul.addr %s539, 16
          %s541 = scalar_lea.vmem [#allocation5], %s540
          %542 = dma.done %s538, 256
        $region56: #{tpu_custom_call.1} parent=51 // pred_fallthru
          _
      $region52: #{tpu_custom_call.1} parent=5 // pred_fallthru
        _
    $region6: #{tpu_custom_call.1} parent=1 // loop_footer
      %s21 = sadd.s32 1, %s17
    $region7: #{tpu_custom_call.1} parent=1 // loop_footer_branch
      %16 = sbr.rel target = $region3
    $region8: #{tpu_custom_call.1} parent=1 // loop_exit
      _
    %543 = vsyncpa [#allocation3], 1
    %s544 = scalar_lea.sflag [#allocation3], 1
    %545 = vsyncpa %s544, 1
    %546 = vsyncpa [#allocation4], 1
    %s547 = scalar_lea.sflag [#allocation4], 1
    %548 = vsyncpa %s547, 1

// kernel: tpu_custom_call.1
$region0: #{tpu_custom_call.1}
  #allocation0 [shape = 'u32[]', space=smem, size = 0x4, offset = 0x4, fixed_abs, tag = 'smem constant byte address 0x4 - core index']
  #allocation1 [shape = 'u32[144,128]{1,0:T(1,128)}', space=vmem, size = 0x12000, scoped, tag = 'internal scratch']
  %s0 = inlined_call_operand.hbm [shape: f32[40,128], index: 0, kind: input, shape index: {}]
  %s1 = inlined_call_operand.vmem [shape: bf16[128,64], index: 1, kind: input, shape index: {}]
  %s2 = inlined_call_operand.vmem [shape: f32[1,64], index: 2, kind: input, shape index: {}]
  %s3 = inlined_call_operand.vmem [shape: bf16[64,256], index: 3, kind: input, shape index: {}]
  %s4 = inlined_call_operand.vmem [shape: f32[1,256], index: 4, kind: input, shape index: {}]
  %s5 = inlined_call_operand.hbm [shape: bf16[40,256], index: 5, kind: output, shape index: {}]
  %s6 = sld [smem:[#allocation0]]
  $region57: #{tpu_custom_call.1} parent=0
    _
  %s8 = ssub.s32 1, %s6
  %s9 = scalar_select 0, %s8, %s6
  $region1: #{tpu_custom_call.1} parent=0
    #allocation2 [shape = 'u8[16384]{0}', space=vmem, size = 0x4000, scoped, tag = 'input window, operand 0']
    #allocation3 [shape = 's32[2]{0}', space=sflag, size = 0x8, scoped, tag = 'scoped memory for tpu_custom_call.1']
    #allocation4 [shape = 's32[2]{0}', space=sflag, size = 0x8, scoped, tag = 'scoped memory for tpu_custom_call.1']
    #allocation5 [shape = 'u8[16384]{0}', space=vmem, size = 0x4000, scoped, tag = 'output window, operand 0']
    %10 = vsyncpa [#allocation3], 0
    %s11 = scalar_lea.sflag [#allocation3], 1
    %12 = vsyncpa %s11, 0
    %13 = vsyncpa [#allocation4], 0
    %s14 = scalar_lea.sflag [#allocation4], 1
    %15 = vsyncpa %s14, 0
    loop: start=0, step=1, limit=5
    $region2: #{tpu_custom_call.1} parent=1 // loop_pre_header
      _
    $region3: #{tpu_custom_call.1} parent=1 // loop_header
      %s17 = sphi 0, %s21
      %p18 = scmp.ge.s32.totalorder %s17, 5
      %s27 = sphi 0, %s29
      %s30 = sphi 0, %s27
      %s31 = sphi 0, %s30
      %s47 = sphi 0, %s31
      %s51 = sphi 0, %s51
      %s53 = sphi 0, %s51
      %s54 = sphi 0, %s53
      %s68 = sphi 0, %s54
      %s72 = sphi 0, %s72
      %s74 = sphi 0, %s72
      %s75 = sphi 0, %s74
      %s89 = sphi 0, %s75
      %s93 = sphi 0, %s93
      %s95 = sphi 0, %s93
      %s96 = sphi 0, %s95
      %s110 = sphi 0, %s96
      %s114 = sphi 0, %s114
      %s116 = sphi 0, %s114
      %s117 = sphi 0, %s116
      %s131 = sphi 0, %s117
      %s137 = sphi 0, %s139
      %s140 = sphi 0, %s137
      %s141 = sphi 0, %s140
      %s157 = sphi 0, %s141
    $region4: #{tpu_custom_call.1} parent=1 // loop_header_branch
      %20 = sbr.rel (%p18) target = $region8
    $region5: #{tpu_custom_call.1} parent=1 // loop_body
      %s22 = ssub.s32 %s17, 1
      %s23 = ssub.s32 %s17, 2
      %s24 = sadd.s32 %s17, 1
      %s25 = ssub.s32 %s17, %s24
      %p26 = scmp.eq.s32.totalorder %s25, 0
      %s28 = sadd.s32 %s27, 1
      %s29 = scalar_select %p26, %s27, %s28
      %p32 = pneg %p26
      %p33 = scmp.eq.s32.totalorder %s17, 2
      %p34 = por %p32, %p33
      %p35 = scmp.ne.s32.totalorder %s27, %s30
      %p36 = scmp.eq.s32.totalorder %s17, 0
      %p37 = por %p35, %p36
      %p38 = scmp.ne.s32.totalorder %s27, %s30
      %p39 = scmp.eq.s32.totalorder %s22, 2
      %p40 = por %p38, %p39
      %p41 = scmp.ne.s32.totalorder %s30, %s31
      %p42 = scmp.eq.s32.totalorder %s22, 0
      %p43 = por %p41, %p42
      %p44 = scmp.ne.s32.totalorder %s30, %s31
      %p45 = scmp.eq.s32.totalorder %s23, 2
      %p46 = por %p44, %p45
      %p48 = scmp.ne.s32.totalorder %s31, %s47
      %p49 = scmp.eq.s32.totalorder %s23, 0
      %p50 = por %p48, %p49
      %s52 = sadd.s32 %s51, 1
      %p55 = scmp.eq.s32.totalorder %s17, 2
      %p56 = scmp.ne.s32.totalorder %s51, %s53
      %p57 = scmp.eq.s32.totalorder %s17, 0
      %p58 = por %p56, %p57
      %p59 = scmp.ne.s32.totalorder %s51, %s53
      %p60 = scmp.eq.s32.totalorder %s22, 2
      %p61 = por %p59, %p60
      %p62 = scmp.ne.s32.totalorder %s53, %s54
      %p63 = scmp.eq.s32.totalorder %s22, 0
      %p64 = por %p62, %p63
      %p65 = scmp.ne.s32.totalorder %s53, %s54
      %p66 = scmp.eq.s32.totalorder %s23, 2
      %p67 = por %p65, %p66
      %p69 = scmp.ne.s32.totalorder %s54, %s68
      %p70 = scmp.eq.s32.totalorder %s23, 0
      %p71 = por %p69, %p70
      %s73 = sadd.s32 %s72, 1
      %p76 = scmp.eq.s32.totalorder %s17, 2
      %p77 = scmp.ne.s32.totalorder %s72, %s74
      %p78 = scmp.eq.s32.totalorder %s17, 0
      %p79 = por %p77, %p78
      %p80 = scmp.ne.s32.totalorder %s72, %s74
      %p81 = scmp.eq.s32.totalorder %s22, 2
      %p82 = por %p80, %p81
      %p83 = scmp.ne.s32.totalorder %s74, %s75
      %p84 = scmp.eq.s32.totalorder %s22, 0
      %p85 = por %p83, %p84
      %p86 = scmp.ne.s32.totalorder %s74, %s75
      %p87 = scmp.eq.s32.totalorder %s23, 2
      %p88 = por %p86, %p87
      %p90 = scmp.ne.s32.totalorder %s75, %s89
      %p91 = scmp.eq.s32.totalorder %s23, 0
      %p92 = por %p90, %p91
      %s94 = sadd.s32 %s93, 1
      %p97 = scmp.eq.s32.totalorder %s17, 2
      %p98 = scmp.ne.s32.totalorder %s93, %s95
      %p99 = scmp.eq.s32.totalorder %s17, 0
      %p100 = por %p98, %p99
      %p101 = scmp.ne.s32.totalorder %s93, %s95
      %p102 = scmp.eq.s32.totalorder %s22, 2
      %p103 = por %p101, %p102
      %p104 = scmp.ne.s32.totalorder %s95, %s96
      %p105 = scmp.eq.s32.totalorder %s22, 0
      %p106 = por %p104, %p105
      %p107 = scmp.ne.s32.totalorder %s95, %s96
      %p108 = scmp.eq.s32.totalorder %s23, 2
      %p109 = por %p107, %p108
      %p111 = scmp.ne.s32.totalorder %s96, %s110
      %p112 = scmp.eq.s32.totalorder %s23, 0
      %p113 = por %p111, %p112
      %s115 = sadd.s32 %s114, 1
      %p118 = scmp.eq.s32.totalorder %s17, 2
      %p119 = scmp.ne.s32.totalorder %s114, %s116
      %p120 = scmp.eq.s32.totalorder %s17, 0
      %p121 = por %p119, %p120
      %p122 = scmp.ne.s32.totalorder %s114, %s116
      %p123 = scmp.eq.s32.totalorder %s22, 2
      %p124 = por %p122, %p123
      %p125 = scmp.ne.s32.totalorder %s116, %s117
      %p126 = scmp.eq.s32.totalorder %s22, 0
      %p127 = por %p125, %p126
      %p128 = scmp.ne.s32.totalorder %s116, %s117
      %p129 = scmp.eq.s32.totalorder %s23, 2
      %p130 = por %p128, %p129
      %p132 = scmp.ne.s32.totalorder %s117, %s131
      %p133 = scmp.eq.s32.totalorder %s23, 0
      %p134 = por %p132, %p133
      %s135 = ssub.s32 %s17, %s24
      %p136 = scmp.eq.s32.totalorder %s135, 0
      %s138 = sadd.s32 %s137, 1
      %s139 = scalar_select %p136, %s137, %s138
      %p142 = pneg %p136
      %p143 = scmp.eq.s32.totalorder %s17, 2
      %p144 = por %p142, %p143
      %p145 = scmp.ne.s32.totalorder %s137, %s140
      %p146 = scmp.eq.s32.totalorder %s17, 0
      %p147 = por %p145, %p146
      %p148 = scmp.ne.s32.totalorder %s137, %s140
      %p149 = scmp.eq.s32.totalorder %s22, 2
      %p150 = por %p148, %p149
      %p151 = scmp.ne.s32.totalorder %s140, %s141
      %p152 = scmp.eq.s32.totalorder %s22, 0
      %p153 = por %p151, %p152
      %p154 = scmp.ne.s32.totalorder %s140, %s141
      %p155 = scmp.eq.s32.totalorder %s23, 2
      %p156 = por %p154, %p155
      %p158 = scmp.ne.s32.totalorder %s141, %s157
      %p159 = scmp.eq.s32.totalorder %s23, 0
      %p160 = por %p158, %p159
      %p161 = scmp.le.s32.totalorder 1, %s17
      %p162 = scmp.lt.s32.totalorder %s17, 4
      %p163 = pnand %p161, %p162
      %p164 = pneg %p163
      // Predicated region
      $region9: #{tpu_custom_call.1} parent=5 // pred_check
        _
      $region10: #{tpu_custom_call.1} parent=5 // pred_check_branch
        %166 = sbr.rel (%p163) target = $region12
      $region11: #{tpu_custom_call.1} parent=5 // pred_region
        %s167 = ssub.s32 %s17, 1
        // Predicated region
        $region13: #{tpu_custom_call.1} parent=11 // pred_check
          %p168 = pneg %p64
        $region14: #{tpu_custom_call.1} parent=11 // pred_check_branch
          %170 = sbr.rel (%p168) target = $region16
        $region15: #{tpu_custom_call.1} parent=11 // pred_region
          _
        $region16: #{tpu_custom_call.1} parent=11 // pred_fallthru
          _
        // Predicated region
        $region17: #{tpu_custom_call.1} parent=11 // pred_check
          %p171 = pneg %p85
        $region18: #{tpu_custom_call.1} parent=11 // pred_check_branch
          %173 = sbr.rel (%p171) target = $region20
        $region19: #{tpu_custom_call.1} parent=11 // pred_region
          _
        $region20: #{tpu_custom_call.1} parent=11 // pred_fallthru
          _
        // Predicated region
        $region21: #{tpu_custom_call.1} parent=11 // pred_check
          %p174 = pneg %p106
        $region22: #{tpu_custom_call.1} parent=11 // pred_check_branch
          %176 = sbr.rel (%p174) target = $region24
        $region23: #{tpu_custom_call.1} parent=11 // pred_region
          _
        $region24: #{tpu_custom_call.1} parent=11 // pred_fallthru
          _
        // Predicated region
        $region25: #{tpu_custom_call.1} parent=11 // pred_check
          %p177 = pneg %p127
        $region26: #{tpu_custom_call.1} parent=11 // pred_check_branch
          %179 = sbr.rel (%p177) target = $region28
        $region27: #{tpu_custom_call.1} parent=11 // pred_region
          _
        $region28: #{tpu_custom_call.1} parent=11 // pred_fallthru
          _
      $region12: #{tpu_custom_call.1} parent=5 // pred_fallthru
        _
      %p180 = scmp.lt.s32.totalorder %s17, 3
      // Predicated region
      $region29: #{tpu_custom_call.1} parent=5 // pred_check
        %p181 = pneg %p180
      $region30: #{tpu_custom_call.1} parent=5 // pred_check_branch
        %183 = sbr.rel (%p181) target = $region32
      $region31: #{tpu_custom_call.1} parent=5 // pred_region
        // Predicated region
        $region33: #{tpu_custom_call.1} parent=31 // pred_check
          %p184 = pneg %p37
        $region34: #{tpu_custom_call.1} parent=31 // pred_check_branch
          %186 = sbr.rel (%p184) target = $region36
        $region35: #{tpu_custom_call.1} parent=31 // pred_region
          %s187 = sand.u32 %s27, 1
          %s188 = scalar_lea.sflag [#allocation3], %s187
          %s189 = sand.u32 %s27, 1
          %s190 = smul.addr %s189, 16
          %s191 = scalar_lea.vmem [#allocation2], %s190
          %s192 = smul.u32 2, %s17
          %s193 = ssub.s32 5, %s192
          %p194 = scmp.lt.s32.totalorder %s193, 2
          %s195 = scalar_select %p194, %s193, 2
          %s196 = smul.u32 128, %s195
          %s198 = ssub.s32 256, %s196
          %199 = vsyncadd %s188, %s198
          %p200 = scmp.ne.s32.totalorder 0, %s196
          %s201 = smul.addr %s192, 128
          %s202 = scalar_lea.hbm %s0, %s201
          %s203 = smul.u32 8, %s195
          %s204 = sshll.u32 %s191, 4
          %s205 = int_to_ptr.vmem [resolvable:$true] %s204
          %s206 = sshll.u32 %s203, 4
          %210 = dma.hbm_to_vmem [thread:$0]  (%p200), %s202, %s206, %s205, %s188, 128, 128, 8
        $region36: #{tpu_custom_call.1} parent=31 // pred_fallthru
          _
      $region32: #{tpu_custom_call.1} parent=5 // pred_fallthru
        _
      %p211 = scmp.le.s32.totalorder 1, %s17
      %p212 = scmp.lt.s32.totalorder %s17, 4
      %p213 = pnand %p211, %p212
      %p214 = pneg %p213
      // Predicated region
      $region37: #{tpu_custom_call.1} parent=5 // pred_check
        _
      $region38: #{tpu_custom_call.1} parent=5 // pred_check_branch
        %216 = sbr.rel (%p213) target = $region40
      $region39: #{tpu_custom_call.1} parent=5 // pred_region
        %s217 = ssub.s32 %s17, 1
        %s218 = sand.u32 %s30, 1
        %s219 = scalar_lea.sflag [#allocation3], %s218
        %s220 = sand.u32 %s30, 1
        %s221 = smul.addr %s220, 16
        %s222 = scalar_lea.vmem [#allocation2], %s221
        // Predicated region
        $region41: #{tpu_custom_call.1} parent=39 // pred_check
          %p223 = pneg %p43
        $region42: #{tpu_custom_call.1} parent=39 // pred_check_branch
          %225 = sbr.rel (%p223) target = $region44
        $region43: #{tpu_custom_call.1} parent=39 // pred_region
          %226 = dma.done %s219, 256
        $region44: #{tpu_custom_call.1} parent=39 // pred_fallthru
          _
        %s227 = sand.u32 %s30, 1
        %s228 = scalar_lea.sflag [#allocation3], %s227
        %s229 = sand.u32 %s30, 1
        %s230 = smul.addr %s229, 16
        %s231 = scalar_lea.vmem [#allocation2], %s230
        %p232 = pneg %p43
        %p233 = pneg %p40
        %p234 = pneg %p64
        %p235 = pneg %p61
        %p236 = pneg %p85
        %p237 = pneg %p82
        %p238 = pneg %p106
        %p239 = pneg %p103
        %p240 = pneg %p127
        %p241 = pneg %p124
        %p242 = pneg %p153
        %p243 = pneg %p150
        %s244 = sand.u32 %s140, 1
        %s245 = scalar_lea.sflag [#allocation4], %s244
        %s246 = sand.u32 %s140, 1
        %s247 = smul.addr %s246, 16
        %s248 = scalar_lea.vmem [#allocation5], %s247
        %s249 = smul.u32 2, %s22
        %s250 = ssub.s32 5, %s249
        %p251 = scmp.lt.s32.totalorder %s250, 2
        %s252 = scalar_select %p251, %s250, 2
        %s253 = smul.u32 128, %s252
        %s254 = smul.u32 2, %s22
        %s255 = ssub.s32 5, %s254
        %p256 = scmp.lt.s32.totalorder %s255, 2
        %s257 = scalar_select %p256, %s255, 2
        %s258 = smul.u32 64, %s257
        %s259 = smul.u32 %s258, 2
        %v261 = vld [vmem:[%s222] sm:$0xff]
        %v262 = vld [vmem:[%s222 + $0x8] sm:$0xff]
        %v263 = vpack.c.bf16 %v262, %v261
        %v264 = vld [vmem:[%s1] sm:$0xf]
        %v265 = vld [vmem:[%s1 + $0x4] sm:$0xf]
        %v266 = vld [vmem:[%s1 + $0x8] sm:$0xf]
        %v267 = vld [vmem:[%s1 + $0xc] sm:$0xf]
        %v268 = vld [vmem:[%s1 + $0x10] sm:$0xf]
        %v269 = vld [vmem:[%s1 + $0x14] sm:$0xf]
        %v270 = vld [vmem:[%s1 + $0x18] sm:$0xf]
        %v271 = vld [vmem:[%s1 + $0x1c] sm:$0xf]
        %v272 = vld [vmem:[%s1 + $0x20] sm:$0xf]
        %v273 = vld [vmem:[%s1 + $0x24] sm:$0xf]
        %v274 = vld [vmem:[%s1 + $0x28] sm:$0xf]
        %v275 = vld [vmem:[%s1 + $0x2c] sm:$0xf]
        %v276 = vld [vmem:[%s1 + $0x30] sm:$0xf]
        %v277 = vld [vmem:[%s1 + $0x34] sm:$0xf]
        %v278 = vld [vmem:[%s1 + $0x38] sm:$0xf]
        %v279 = vld [vmem:[%s1 + $0x3c] sm:$0xf]
        %v280 = vld [vmem:[%s2] sm:$0x1]
        %v282 = vlaneseq
        %v283 = vshrl.u32 %v282, 7
        %v284 = vsub.s32 0, %v283
        %v285 = vrot.slane %v280, %v284
        %v303 = vunpack.c.l.b16 %v264
        %v304 = vunpack.c.l.b16 %v265
        %v305 = vunpack.c.l.b16 %v266
        %v306 = vunpack.c.l.b16 %v267
        %v307 = vunpack.c.l.b16 %v268
        %v308 = vunpack.c.l.b16 %v269
        %v309 = vunpack.c.l.b16 %v270
        %v310 = vunpack.c.l.b16 %v271
        %v311 = vunpack.c.l.b16 %v272
        %v312 = vunpack.c.l.b16 %v273
        %v313 = vunpack.c.l.b16 %v274
        %v314 = vunpack.c.l.b16 %v275
        %v315 = vunpack.c.l.b16 %v276
        %v316 = vunpack.c.l.b16 %v277
        %v317 = vunpack.c.l.b16 %v278
        %v318 = vunpack.c.l.b16 %v279
        %v319 = vpack.c.b16 %v304, %v303
        %v320 = vpack.c.b16 %v306, %v305
        %v321 = vpack.c.b16 %v308, %v307
        %v322 = vpack.c.b16 %v310, %v309
        %v323 = vpack.c.b16 %v312, %v311
        %v324 = vpack.c.b16 %v314, %v313
        %v325 = vpack.c.b16 %v316, %v315
        %v326 = vpack.c.b16 %v318, %v317
        %335 = vmatprep.subr.bf16.mxu0 0
        %336 = vmatpush1.bf16.msra.mxu0 %v326
        %337 = vmatprep.subr.bf16.mxu0 0
        %338 = vmatpush1.bf16.msra.mxu0 %v325
        %339 = vmatprep.subr.bf16.mxu0 0
        %340 = vmatpush1.bf16.msra.mxu0 %v324
        %341 = vmatprep.subr.bf16.mxu0 0
        %342 = vmatpush1.bf16.msra.mxu0 %v323
        %343 = vmatprep.subr.bf16.mxu0 0
        %344 = vmatpush1.bf16.msra.mxu0 %v322
        %345 = vmatprep.subr.bf16.mxu0 0
        %346 = vmatpush1.bf16.msra.mxu0 %v321
        %347 = vmatprep.subr.bf16.mxu0 0
        %348 = vmatpush1.bf16.msra.mxu0 %v320
        %349 = vmatprep.subr.bf16.mxu0 0
        %350 = vmatpush1.bf16.msra.mxu0 %v319
        %351 = vmatprep.subr.bf16.mxu0 0
        %352 = vmatpush2.bf16.msra.mxu0 0
        %353 = vmatprep.subr.bf16.mxu0 0
        %354 = vmatpush2.bf16.msra.mxu0 0
        %355 = vmatprep.subr.bf16.mxu0 0
        %356 = vmatpush2.bf16.msra.mxu0 0
        %357 = vmatprep.subr.bf16.mxu0 0
        %358 = vmatpush2.bf16.msra.mxu0 0
        %359 = vmatprep.subr.bf16.mxu0 0
        %360 = vmatpush2.bf16.msra.mxu0 0
        %361 = vmatprep.subr.bf16.mxu0 0
        %362 = vmatpush2.bf16.msra.mxu0 0
        %363 = vmatprep.subr.bf16.mxu0 0
        %364 = vmatpush2.bf16.msra.mxu0 0
        %365 = vmatprep.subr.bf16.mxu0 0
        %366 = vmatpush2.bf16.msra.mxu0 0
        %367 = vmatprep.mubr.bf16.mxu0 0
        %368 = vmatmul.mubr.bf16.gmra.mxu0 %v263
        %v369 = vpop.f32.mrf.mxu0
        %v370 = vadd.f32 %v285, %v369
        %v371 = vpop.f32.mrf.mxu0
        %v372 = vpop.f32.mrf.mxu0
        %v373 = vadd.f32 %v285, %v372
        %v374 = vpop.f32.mrf.mxu0
        %375 = vdwg.mxu0
        %v376 = vmax.f32 %v370, 0.0
        %v377 = vmax.f32 %v373, 0.0
        %v378 = vpack.c.bf16 %v377, %v376
        %v379 = vld [vmem:[%s3] sm:$0xff]
        %v380 = vld [vmem:[%s3 + $0x8] sm:$0xff]
        %v381 = vld [vmem:[%s3 + $0x10] sm:$0xff]
        %v382 = vld [vmem:[%s3 + $0x18] sm:$0xff]
        %v383 = vld [vmem:[%s3 + $0x20] sm:$0xff]
        %v384 = vld [vmem:[%s3 + $0x28] sm:$0xff]
        %v385 = vld [vmem:[%s3 + $0x30] sm:$0xff]
        %v386 = vld [vmem:[%s3 + $0x38] sm:$0xff]
        %v387 = vld [vmem:[%s4] sm:$0x3]
        %v389 = vlaneseq
        %v390 = vshrl.u32 %v389, 7
        %v391 = vsub.s32 0, %v390
        %v392 = vrot.slane %v387, %v391
        %v393 = vlaneseq
        %v394 = vshrl.u32 %v393, 7
        %v395 = vsub.s32 1, %v394
        %v396 = vrot.slane %v387, %v395
        %v407 = vunpack.c.l.b16 %v379
        %v408 = vunpack.c.h.b16 %v379
        %v409 = vunpack.c.l.b16 %v380
        %v410 = vunpack.c.h.b16 %v380
        %v411 = vunpack.c.l.b16 %v381
        %v412 = vunpack.c.h.b16 %v381
        %v413 = vunpack.c.l.b16 %v382
        %v414 = vunpack.c.h.b16 %v382
        %v415 = vunpack.c.l.b16 %v383
        %v416 = vunpack.c.h.b16 %v383
        %v417 = vunpack.c.l.b16 %v384
        %v418 = vunpack.c.h.b16 %v384
        %v419 = vunpack.c.l.b16 %v385
        %v420 = vunpack.c.h.b16 %v385
        %v421 = vunpack.c.l.b16 %v386
        %v422 = vunpack.c.h.b16 %v386
        %v423 = vpack.c.b16 %v409, %v407
        %v424 = vpack.c.b16 %v410, %v408
        %v425 = vpack.c.b16 %v413, %v411
        %v426 = vpack.c.b16 %v414, %v412
        %v427 = vpack.c.b16 %v417, %v415
        %v428 = vpack.c.b16 %v418, %v416
        %v429 = vpack.c.b16 %v421, %v419
        %v430 = vpack.c.b16 %v422, %v420
        %vm439 = vcmask 523264
        %v441 = vsel %vm439, %v378, 0
        %443 = vmatprep.subr.bf16.mxu0 0
        %444 = vmatpush1.bf16.msra.mxu0 0
        %445 = vmatprep.subr.bf16.mxu0 0
        %446 = vmatpush1.bf16.msra.mxu0 0
        %447 = vmatprep.subr.bf16.mxu0 0
        %448 = vmatpush1.bf16.msra.mxu0 0
        %449 = vmatprep.subr.bf16.mxu0 0
        %450 = vmatpush1.bf16.msra.mxu0 0
        %451 = vmatprep.subr.bf16.mxu0 %v430
        %452 = vmatpush1.bf16.msra.mxu0 %v429
        %453 = vmatprep.subr.bf16.mxu0 %v428
        %454 = vmatpush1.bf16.msra.mxu0 %v427
        %455 = vmatprep.subr.bf16.mxu0 %v426
        %456 = vmatpush1.bf16.msra.mxu0 %v425
        %457 = vmatprep.subr.bf16.mxu0 %v424
        %458 = vmatpush1.bf16.msra.mxu0 %v423
        %459 = vmatprep.subr.bf16.mxu0 0
        %460 = vmatpush2.bf16.msra.mxu0 0
        %461 = vmatprep.subr.bf16.mxu0 0
        %462 = vmatpush2.bf16.msra.mxu0 0
        %463 = vmatprep.subr.bf16.mxu0 0
        %464 = vmatpush2.bf16.msra.mxu0 0
        %465 = vmatprep.subr.bf16.mxu0 0
        %466 = vmatpush2.bf16.msra.mxu0 0
        %467 = vmatprep.subr.bf16.mxu0 0
        %468 = vmatpush2.bf16.msra.mxu0 0
        %469 = vmatprep.subr.bf16.mxu0 0
        %470 = vmatpush2.bf16.msra.mxu0 0
        %471 = vmatprep.subr.bf16.mxu0 0
        %472 = vmatpush2.bf16.msra.mxu0 0
        %473 = vmatprep.subr.bf16.mxu0 0
        %474 = vmatpush2.bf16.msra.mxu0 0
        %475 = vmatprep.mubr.bf16.mxu0 0
        %476 = vmatmul.mubr.bf16.gmra.mxu0 %v441
        %v477 = vpop.f32.mrf.mxu0
        %v478 = vadd.f32 %v392, %v477
        %v479 = vpop.f32.mrf.mxu0
        %v480 = vadd.f32 %v396, %v479
        %v481 = vpop.f32.mrf.mxu0
        %v482 = vadd.f32 %v392, %v481
        %v483 = vpop.f32.mrf.mxu0
        %v484 = vadd.f32 %v396, %v483
        %485 = vdwg.mxu0
        %v486 = vpack.c.bf16 %v482, %v478
        %v487 = vpack.c.bf16 %v484, %v480
        %v490 = vunpack.c.l.b16 %v486
        %v491 = vunpack.c.l.b16 %v487
        %v492 = vunpack.c.h.b16 %v486
        %v493 = vunpack.c.h.b16 %v487
        %v494 = vpack.c.b16 %v491, %v490
        %v495 = vpack.c.b16 %v493, %v492
        %498 = vst [vmem:[%s248] sm:$0xff] %v494
        %499 = vst [vmem:[%s248 + $0x8] sm:$0xff] %v495
        %s500 = sand.u32 %s140, 1
        %s501 = scalar_lea.sflag [#allocation4], %s500
        %s502 = sand.u32 %s140, 1
        %s503 = smul.addr %s502, 16
        %s504 = scalar_lea.vmem [#allocation5], %s503
        // Predicated region
        $region45: #{tpu_custom_call.1} parent=39 // pred_check
          %p505 = pneg %p150
        $region46: #{tpu_custom_call.1} parent=39 // pred_check_branch
          %507 = sbr.rel (%p505) target = $region48
        $region47: #{tpu_custom_call.1} parent=39 // pred_region
          %s508 = smul.u32 2, %s22
          %s509 = ssub.s32 5, %s508
          %p510 = scmp.lt.s32.totalorder %s509, 2
          %s511 = scalar_select %p510, %s509, 2
          %s512 = smul.u32 64, %s511
          %s513 = smul.u32 %s512, 2
          %s515 = ssub.s32 256, %s513
          %516 = vsyncadd %s501, %s515
          %p517 = scmp.ne.s32.totalorder 0, %s513
          %s518 = smul.addr %s508, 2
          %s519 = smul.addr %s518, 64
          %s520 = scalar_lea.hbm %s5, %s519
          %s521 = smul.u32 8, %s511
          %s522 = sshll.u32 %s504, 4
          %s523 = int_to_ptr.vmem [resolvable:$true] %s522
          %s524 = sshll.u32 %s521, 4
          %528 = dma.vmem_to_hbm [thread:$0]  (%p517), %s523, %s524, %s520, %s501, 128, 128, 8
        $region48: #{tpu_custom_call.1} parent=39 // pred_fallthru
          _
      $region40: #{tpu_custom_call.1} parent=5 // pred_fallthru
        _
      %p529 = scmp.le.s32.totalorder 2, %s17
      // Predicated region
      $region49: #{tpu_custom_call.1} parent=5 // pred_check
        %p530 = pneg %p529
      $region50: #{tpu_custom_call.1} parent=5 // pred_check_branch
        %532 = sbr.rel (%p530) target = $region52
      $region51: #{tpu_custom_call.1} parent=5 // pred_region
        %s533 = ssub.s32 %s17, 2
        // Predicated region
        $region53: #{tpu_custom_call.1} parent=51 // pred_check
          %p534 = pneg %p156
        $region54: #{tpu_custom_call.1} parent=51 // pred_check_branch
          %536 = sbr.rel (%p534) target = $region56
        $region55: #{tpu_custom_call.1} parent=51 // pred_region
          %s537 = sand.u32 %s141, 1
          %s538 = scalar_lea.sflag [#allocation4], %s537
          %s539 = sand.u32 %s141, 1
          %s540 = smul.addr %s539, 16
          %s541 = scalar_lea.vmem [#allocation5], %s540
          %542 = dma.done %s538, 256
        $region56: #{tpu_custom_call.1} parent=51 // pred_fallthru
          _
      $region52: #{tpu_custom_call.1} parent=5 // pred_fallthru
        _
    $region6: #{tpu_custom_call.1} parent=1 // loop_footer
      %s21 = sadd.s32 1, %s17
    $region7: #{tpu_custom_call.1} parent=1 // loop_footer_branch
      %16 = sbr.rel target = $region3
    $region8: #{tpu_custom_call.1} parent=1 // loop_exit
      _
    %543 = vsyncpa [#allocation3], 1
    %s544 = scalar_lea.sflag [#allocation3], 1
    %545 = vsyncpa %s544, 1
    %546 = vsyncpa [#allocation4], 1
    %s547 = scalar_lea.sflag [#allocation4], 1
    %548 = vsyncpa %s547, 1

</llo_original>
